<compile_context>
chip_gen: v5e
topology: v5e:2x2
jax: 0.10.0
libtpu: 0.0.40
codegen_flags: <defaults>
</compile_context>

<pallas_src>
import functools

import jax
import jax.numpy as jnp
from jax import lax
from jax.experimental import pallas as pl
from jax.experimental.pallas import tpu as pltpu

EPS = 1e-12


# ----------------------------------------------------------------------------
# Fused kernel: power iteration (VPU/XLU) + in-kernel im2col + conv (MXU)
# ----------------------------------------------------------------------------
def _sn_conv_kernel(w_ref, wk_ref, u_ref, xf_ref, b_ref,
                    y_ref, u_out_ref, v_out_ref,
                    *, cin, kh, kw, wp, ho, wo, n_wide, power_iterations):
    # w_ref : (Cout, K) f32   w_bar.view(height,-1), original (channel-major) cols
    # wk_ref: (Cout, K) f32   same weights, tap-major columns (channel fastest)
    # u_ref : (Cout, 1) f32   power-iteration vector
    # xf_ref: (1, Cin, Hp*Wp) f32  zero-padded input of this batch, spatially flat
    # b_ref : (Cout, 1) f32   conv bias
    # y_ref : (1, Cout, Ho*Wo) f32 lane-dense output block
    w = w_ref[...]
    u = u_ref[...]

    # ---- power iteration: VPU muls + XLU reductions (MXU is kept for the conv)
    v = jnp.zeros((1, w.shape[1]), jnp.float32)
    w_v = jnp.zeros_like(u)
    for _ in range(power_iterations):
        wt_u = jnp.sum(w * u, axis=0, keepdims=True)             # (1, K)   = W^T u
        v = wt_u / (jnp.sqrt(jnp.sum(wt_u * wt_u)) + EPS)        # l2normalize
        w_v = jnp.sum(w * v, axis=1, keepdims=True)              # (Cout,1) = W v
        u = w_v / (jnp.sqrt(jnp.sum(w_v * w_v)) + EPS)           # l2normalize
    sigma = jnp.sum(u * w_v, keepdims=True)                      # (1,1) = u . (W v)
    # EUP approx reciprocal (off the VPU divide path) + one Newton step to
    # recover full f32 accuracy, so the output tolerance stays tight.
    inv_sigma = pl.reciprocal(sigma, approx=True)
    inv_sigma = inv_sigma * (2.0 - sigma * inv_sigma)

    # ---- fused im2col + conv on the MXU (wide-N trick) ----
    # Wide output column n = h*Wp + w_out; the input for tap (ki, kj) is then the
    # CONTIGUOUS slice xf[:, ki*Wp+kj : ki*Wp+kj+n_wide] (no in-kernel reshape).
    # Columns with w_out >= Wo are junk and are simply not stored.
    xf = xf_ref[0]                                               # (Cin, Hp*Wp)
    wk = wk_ref[...]
    acc = jnp.zeros((w.shape[0], n_wide), jnp.float32)
    for ki in range(kh):
        for kj in range(kw):
            g = ki * kw + kj
            acc = acc + jnp.dot(wk[:, g * cin:(g + 1) * cin],
                                xf[:, ki * wp + kj: ki * wp + kj + n_wide],
                                preferred_element_type=jnp.float32)

    out_wide = acc * inv_sigma + b_ref[...]                      # f32 epilogue

    # Compact row stride Wp -> Wo into the lane-dense (Cout, Ho*Wo) output block.
    for h in range(ho):
        y_ref[0, :, h * wo:(h + 1) * wo] = out_wide[:, h * wp:h * wp + wo]

    u_out_ref[0] = u
    v_out_ref[0] = v


# ----------------------------------------------------------------------------
# Wrapper: pad + free reshapes + single pallas_call (grid over batch)
# ----------------------------------------------------------------------------
def spectral_norm_conv_forward(x, w_bar, bias, u, *, padding=1,
                               power_iterations=1):
    """Forward of SpectralNorm(nn.Conv2d(Cin, Cout, (kh,kw), stride=1, padding)).

    x: (B,Cin,H,W) NCHW; w_bar: (Cout,Cin,kh,kw) OIHW; bias: (Cout,); u: (Cout,).
    Returns (y NCHW, updated u (Cout,), updated v (Cin*kh*kw,))."""
    if power_iterations < 1:
        raise ValueError("power_iterations must be >= 1 (sigma undefined otherwise)")
    B, Cin, Hi, Wi = x.shape
    Cout, Cin_w, kh, kw = w_bar.shape
    if Cin_w != Cin:
        raise ValueError("channel mismatch between x and w_bar")
    # TODO(synk): stride != 1 has no equivalent here (module wraps a stride-1 conv).
    Hp, Wp = Hi + 2 * padding, Wi + 2 * padding
    Ho, Wo = Hp - kh + 1, Wp - kw + 1
    K = Cin * kh * kw
    n_wide = (Ho - 1) * Wp + Wo          # wide output width (row stride Wp)

    # Only non-trivial wrapper ops: the zero-pad (required by 'same' conv) and a
    # ~1 KiB transpose of the weights into tap-major column order for the matmul.
    xf = jnp.pad(x.astype(jnp.float32),
                 ((0, 0), (0, 0), (padding, padding), (padding, padding))
                 ).reshape(B, Cin, Hp * Wp)                       # reshape is free
    w_mat = w_bar.reshape(Cout, K).astype(jnp.float32)            # free view
    w_tap = jnp.transpose(w_bar, (0, 2, 3, 1)).reshape(Cout, K).astype(jnp.float32)

    kernel = functools.partial(
        _sn_conv_kernel, cin=Cin, kh=kh, kw=kw, wp=Wp, ho=Ho, wo=Wo,
        n_wide=n_wide, power_iterations=power_iterations)

    y_flat, u_all, v_all = pl.pallas_call(
        kernel,
        grid=(B,),
        out_shape=(jax.ShapeDtypeStruct((B, Cout, Ho * Wo), jnp.float32),
                   jax.ShapeDtypeStruct((B, Cout, 1), jnp.float32),
                   jax.ShapeDtypeStruct((B, 1, K), jnp.float32)),
        in_specs=[pl.BlockSpec((Cout, K), lambda b: (0, 0)),          # w (power iter)
                  pl.BlockSpec((Cout, K), lambda b: (0, 0)),          # w (tap-major)
                  pl.BlockSpec((Cout, 1), lambda b: (0, 0)),          # u
                  pl.BlockSpec((1, Cin, Hp * Wp), lambda b: (b, 0, 0)),  # padded x
                  pl.BlockSpec((Cout, 1), lambda b: (0, 0))],         # bias
        out_specs=(pl.BlockSpec((1, Cout, Ho * Wo), lambda b: (b, 0, 0)),
                   pl.BlockSpec((1, Cout, 1), lambda b: (b, 0, 0)),
                   pl.BlockSpec((1, 1, K), lambda b: (b, 0, 0))),
        compiler_params=pltpu.CompilerParams(
            dimension_semantics=("parallel",)),   # v7x: one batch per TensorCore
    )(w_mat, w_tap, u.reshape(Cout, 1).astype(jnp.float32), xf,
      bias.reshape(Cout, 1).astype(jnp.float32))

    y = y_flat.reshape(B, Cout, Ho, Wo)        # batch-major -> NCHW is a free reshape
    # u/v are recomputed identically per batch grid step; row 0 is canonical.
    return y, u_all[0, :, 0], v_all[0, 0, :]


if __name__ == "__main__":
    key = jax.random.PRNGKey(0)
    k1, k2, k3, k4 = jax.random.split(key, 4)

    B, Cin, Hs, Ws = 2, 4, 16, 16
    Cout, kh, kw = 8, 3, 3

    x = jax.random.normal(k1, (B, Cin, Hs, Ws), jnp.float32)
    w_bar = jax.random.normal(k2, (Cout, Cin, kh, kw), jnp.float32) * 0.1
    bias = jax.random.normal(k3, (Cout,), jnp.float32) * 0.1
    u0 = jax.random.normal(k4, (Cout,), jnp.float32)
    u0 = u0 / (jnp.linalg.norm(u0) + EPS)          # l2normalize, as in _make_params

    y, u_new, v_new = spectral_norm_conv_forward(x, w_bar, bias, u0)
    y = jax.block_until_ready(y)

    # Pure-JAX f32 reference (same math as the torch module).
    h_ref = w_bar.reshape(Cout, -1)
    v_r = h_ref.T @ u0
    v_r = v_r / (jnp.linalg.norm(v_r) + EPS)
    u_r = h_ref @ v_r
    u_r = u_r / (jnp.linalg.norm(u_r) + EPS)
    sigma = u_r @ (h_ref @ v_r)
    w_norm = w_bar / sigma
    y_ref = lax.conv_general_dilated(
        x, w_norm, window_strides=(1, 1), padding=((1, 1), (1, 1)),
        dimension_numbers=("NCHW", "OIHW", "NCHW")) + bias[None, :, None, None]

    assert y.shape == (B, Cout, Hs, Ws)
    # Power-iteration vectors computed in f32 inside the kernel -> tight tolerance.
    assert jnp.allclose(u_new, u_r, atol=1e-4, rtol=1e-4)
    assert jnp.allclose(v_new, v_r, atol=1e-4, rtol=1e-4)
    # All-f32 matmul + Newton-corrected reciprocal -> tight output tolerance.
    assert jnp.allclose(y, y_ref, atol=1e-3, rtol=1e-3)
    print("KERNEL_OK")
</pallas_src>

<mosaic_0001>
module attributes {stable_mosaic.version = 11 : i64} {
  func.func @_sn_conv_kernel(%arg0: i32, %arg1: memref<8x36xf32, #tpu.memory_space<vmem>>, %arg2: memref<8x36xf32, #tpu.memory_space<vmem>>, %arg3: memref<8x1xf32, #tpu.memory_space<vmem>>, %arg4: memref<1x4x324xf32, #tpu.memory_space<vmem>>, %arg5: memref<8x1xf32, #tpu.memory_space<vmem>>, %arg6: memref<1x8x256xf32, #tpu.memory_space<vmem>>, %arg7: memref<1x8x1xf32, #tpu.memory_space<vmem>>, %arg8: memref<1x1x36xf32, #tpu.memory_space<vmem>>) attributes {dimension_semantics = [#tpu.dimension_semantics<parallel>], iteration_bounds = array<i64: 2>, scalar_prefetch = 0 : i64, scratch_operands = 0 : i64, tpu.core_type = #tpu.core_type<tc>, window_params = [{pipeline_mode = #tpu.pipeline_mode<synchronous>, transform_indices = @transform_0, window_bounds = array<i64: 8, 36>}, {pipeline_mode = #tpu.pipeline_mode<synchronous>, transform_indices = @transform_1, window_bounds = array<i64: 8, 36>}, {pipeline_mode = #tpu.pipeline_mode<synchronous>, transform_indices = @transform_2, window_bounds = array<i64: 8, 1>}, {transform_indices = @transform_3, window_bounds = array<i64: 1, 4, 324>}, {pipeline_mode = #tpu.pipeline_mode<synchronous>, transform_indices = @transform_4, window_bounds = array<i64: 8, 1>}, {transform_indices = @transform_5, window_bounds = array<i64: 1, 8, 256>}, {transform_indices = @transform_6, window_bounds = array<i64: 1, 8, 1>}, {transform_indices = @transform_7, window_bounds = array<i64: 1, 1, 36>}]} {
    %c0 = arith.constant 0 : index
    %c0_0 = arith.constant 0 : index
    %0 = vector.load %arg1[%c0, %c0_0] : memref<8x36xf32, #tpu.memory_space<vmem>>, vector<8x36xf32>
    %c0_1 = arith.constant 0 : index
    %c0_2 = arith.constant 0 : index
    %1 = vector.load %arg3[%c0_1, %c0_2] : memref<8x1xf32, #tpu.memory_space<vmem>>, vector<8x1xf32>
    %2 = vector.broadcast %1 : vector<8x1xf32> to vector<8x36xf32>
    %3 = arith.mulf %0, %2 : vector<8x36xf32>
    %cst = arith.constant dense<0.000000e+00> : vector<36xf32>
    %4 = vector.multi_reduction <add>, %3, %cst [0] : vector<8x36xf32> to vector<36xf32>
    %5 = vector.shape_cast %4 : vector<36xf32> to vector<1x36xf32>
    %6 = arith.mulf %5, %5 : vector<1x36xf32>
    %7 = vector.shape_cast %6 : vector<1x36xf32> to vector<1x1x36xf32>
    %cst_3 = arith.constant dense<0.000000e+00> : vector<1xf32>
    %8 = vector.multi_reduction <add>, %7, %cst_3 [1, 2] : vector<1x1x36xf32> to vector<1xf32>
    %9 = vector.shape_cast %8 : vector<1xf32> to vector<1x1x1xf32>
    %10 = vector.extract %9[0, 0, 0] : f32 from vector<1x1x1xf32>
    %11 = math.sqrt %10 : f32
    %cst_4 = arith.constant 9.99999996E-13 : f32
    %12 = arith.addf %11, %cst_4 : f32
    %13 = vector.broadcast %12 : f32 to vector<1x36xf32>
    %14 = arith.divf %5, %13 : vector<1x36xf32>
    %15 = vector.broadcast %14 : vector<1x36xf32> to vector<8x36xf32>
    %16 = arith.mulf %0, %15 : vector<8x36xf32>
    %cst_5 = arith.constant dense<0.000000e+00> : vector<8xf32>
    %17 = vector.multi_reduction <add>, %16, %cst_5 [1] : vector<8x36xf32> to vector<8xf32>
    %18 = vector.shape_cast %17 : vector<8xf32> to vector<8x1xf32>
    %19 = arith.mulf %18, %18 : vector<8x1xf32>
    %20 = vector.shape_cast %19 : vector<8x1xf32> to vector<1x8x1xf32>
    %cst_6 = arith.constant dense<0.000000e+00> : vector<1xf32>
    %21 = vector.multi_reduction <add>, %20, %cst_6 [1, 2] : vector<1x8x1xf32> to vector<1xf32>
    %22 = vector.shape_cast %21 : vector<1xf32> to vector<1x1x1xf32>
    %23 = vector.extract %22[0, 0, 0] : f32 from vector<1x1x1xf32>
    %24 = math.sqrt %23 : f32
    %cst_7 = arith.constant 9.99999996E-13 : f32
    %25 = arith.addf %24, %cst_7 : f32
    %26 = vector.broadcast %25 : f32 to vector<8x1xf32>
    %27 = arith.divf %18, %26 : vector<8x1xf32>
    %28 = arith.mulf %27, %18 : vector<8x1xf32>
    %29 = vector.shape_cast %28 : vector<8x1xf32> to vector<1x8x1xf32>
    %cst_8 = arith.constant dense<0.000000e+00> : vector<1xf32>
    %30 = vector.multi_reduction <add>, %29, %cst_8 [1, 2] : vector<1x8x1xf32> to vector<1xf32>
    %31 = vector.shape_cast %30 : vector<1xf32> to vector<1x1x1xf32>
    %32 = vector.extract %31[0, 0, 0] : f32 from vector<1x1x1xf32>
    %33 = vector.broadcast %32 : f32 to vector<1x1xf32>
    %34 = tpu.reciprocal %33 {approx = true} : vector<1x1xf32> -> vector<1x1xf32>
    %35 = arith.mulf %33, %34 : vector<1x1xf32>
    %cst_9 = arith.constant 2.000000e+00 : f32
    %36 = vector.broadcast %cst_9 : f32 to vector<1x1xf32>
    %37 = arith.subf %36, %35 : vector<1x1xf32>
    %38 = arith.mulf %34, %37 : vector<1x1xf32>
    %c0_10 = arith.constant 0 : index
    %c0_11 = arith.constant 0 : index
    %c0_12 = arith.constant 0 : index
    %39 = vector.load %arg4[%c0_10, %c0_11, %c0_12] : memref<1x4x324xf32, #tpu.memory_space<vmem>>, vector<1x4x324xf32>
    %40 = vector.shape_cast %39 : vector<1x4x324xf32> to vector<4x324xf32>
    %c0_13 = arith.constant 0 : index
    %c0_14 = arith.constant 0 : index
    %41 = vector.load %arg2[%c0_13, %c0_14] : memref<8x36xf32, #tpu.memory_space<vmem>>, vector<8x36xf32>
    %cst_15 = arith.constant 0.000000e+00 : f32
    %42 = vector.broadcast %cst_15 : f32 to vector<8x286xf32>
    %43 = vector.extract_strided_slice %41 {offsets = [0, 0], sizes = [8, 4], strides = [1, 1]} : vector<8x36xf32> to vector<8x4xf32>
    %44 = vector.extract_strided_slice %40 {offsets = [0, 0], sizes = [4, 286], strides = [1, 1]} : vector<4x324xf32> to vector<4x286xf32>
    %cst_16 = arith.constant dense<0.000000e+00> : vector<8x286xf32>
    %45 = tpu.matmul %43, %44, %cst_16 {dimension_numbers = #tpu.dot_dimension_numbers<[1], [0], [0], [1], [0, 0, 1, 1], [], []>} : vector<8x4xf32>, vector<4x286xf32>, vector<8x286xf32> -> vector<8x286xf32>
    %46 = arith.addf %42, %45 : vector<8x286xf32>
    %47 = vector.extract_strided_slice %41 {offsets = [0, 4], sizes = [8, 4], strides = [1, 1]} : vector<8x36xf32> to vector<8x4xf32>
    %48 = vector.extract_strided_slice %40 {offsets = [0, 1], sizes = [4, 286], strides = [1, 1]} : vector<4x324xf32> to vector<4x286xf32>
    %cst_17 = arith.constant dense<0.000000e+00> : vector<8x286xf32>
    %49 = tpu.matmul %47, %48, %cst_17 {dimension_numbers = #tpu.dot_dimension_numbers<[1], [0], [0], [1], [0, 0, 1, 1], [], []>} : vector<8x4xf32>, vector<4x286xf32>, vector<8x286xf32> -> vector<8x286xf32>
    %50 = arith.addf %46, %49 : vector<8x286xf32>
    %51 = vector.extract_strided_slice %41 {offsets = [0, 8], sizes = [8, 4], strides = [1, 1]} : vector<8x36xf32> to vector<8x4xf32>
    %52 = vector.extract_strided_slice %40 {offsets = [0, 2], sizes = [4, 286], strides = [1, 1]} : vector<4x324xf32> to vector<4x286xf32>
    %cst_18 = arith.constant dense<0.000000e+00> : vector<8x286xf32>
    %53 = tpu.matmul %51, %52, %cst_18 {dimension_numbers = #tpu.dot_dimension_numbers<[1], [0], [0], [1], [0, 0, 1, 1], [], []>} : vector<8x4xf32>, vector<4x286xf32>, vector<8x286xf32> -> vector<8x286xf32>
    %54 = arith.addf %50, %53 : vector<8x286xf32>
    %55 = vector.extract_strided_slice %41 {offsets = [0, 12], sizes = [8, 4], strides = [1, 1]} : vector<8x36xf32> to vector<8x4xf32>
    %56 = vector.extract_strided_slice %40 {offsets = [0, 18], sizes = [4, 286], strides = [1, 1]} : vector<4x324xf32> to vector<4x286xf32>
    %cst_19 = arith.constant dense<0.000000e+00> : vector<8x286xf32>
    %57 = tpu.matmul %55, %56, %cst_19 {dimension_numbers = #tpu.dot_dimension_numbers<[1], [0], [0], [1], [0, 0, 1, 1], [], []>} : vector<8x4xf32>, vector<4x286xf32>, vector<8x286xf32> -> vector<8x286xf32>
    %58 = arith.addf %54, %57 : vector<8x286xf32>
    %59 = vector.extract_strided_slice %41 {offsets = [0, 16], sizes = [8, 4], strides = [1, 1]} : vector<8x36xf32> to vector<8x4xf32>
    %60 = vector.extract_strided_slice %40 {offsets = [0, 19], sizes = [4, 286], strides = [1, 1]} : vector<4x324xf32> to vector<4x286xf32>
    %cst_20 = arith.constant dense<0.000000e+00> : vector<8x286xf32>
    %61 = tpu.matmul %59, %60, %cst_20 {dimension_numbers = #tpu.dot_dimension_numbers<[1], [0], [0], [1], [0, 0, 1, 1], [], []>} : vector<8x4xf32>, vector<4x286xf32>, vector<8x286xf32> -> vector<8x286xf32>
    %62 = arith.addf %58, %61 : vector<8x286xf32>
    %63 = vector.extract_strided_slice %41 {offsets = [0, 20], sizes = [8, 4], strides = [1, 1]} : vector<8x36xf32> to vector<8x4xf32>
    %64 = vector.extract_strided_slice %40 {offsets = [0, 20], sizes = [4, 286], strides = [1, 1]} : vector<4x324xf32> to vector<4x286xf32>
    %cst_21 = arith.constant dense<0.000000e+00> : vector<8x286xf32>
    %65 = tpu.matmul %63, %64, %cst_21 {dimension_numbers = #tpu.dot_dimension_numbers<[1], [0], [0], [1], [0, 0, 1, 1], [], []>} : vector<8x4xf32>, vector<4x286xf32>, vector<8x286xf32> -> vector<8x286xf32>
    %66 = arith.addf %62, %65 : vector<8x286xf32>
    %67 = vector.extract_strided_slice %41 {offsets = [0, 24], sizes = [8, 4], strides = [1, 1]} : vector<8x36xf32> to vector<8x4xf32>
    %68 = vector.extract_strided_slice %40 {offsets = [0, 36], sizes = [4, 286], strides = [1, 1]} : vector<4x324xf32> to vector<4x286xf32>
    %cst_22 = arith.constant dense<0.000000e+00> : vector<8x286xf32>
    %69 = tpu.matmul %67, %68, %cst_22 {dimension_numbers = #tpu.dot_dimension_numbers<[1], [0], [0], [1], [0, 0, 1, 1], [], []>} : vector<8x4xf32>, vector<4x286xf32>, vector<8x286xf32> -> vector<8x286xf32>
    %70 = arith.addf %66, %69 : vector<8x286xf32>
    %71 = vector.extract_strided_slice %41 {offsets = [0, 28], sizes = [8, 4], strides = [1, 1]} : vector<8x36xf32> to vector<8x4xf32>
    %72 = vector.extract_strided_slice %40 {offsets = [0, 37], sizes = [4, 286], strides = [1, 1]} : vector<4x324xf32> to vector<4x286xf32>
    %cst_23 = arith.constant dense<0.000000e+00> : vector<8x286xf32>
    %73 = tpu.matmul %71, %72, %cst_23 {dimension_numbers = #tpu.dot_dimension_numbers<[1], [0], [0], [1], [0, 0, 1, 1], [], []>} : vector<8x4xf32>, vector<4x286xf32>, vector<8x286xf32> -> vector<8x286xf32>
    %74 = arith.addf %70, %73 : vector<8x286xf32>
    %75 = vector.extract_strided_slice %41 {offsets = [0, 32], sizes = [8, 4], strides = [1, 1]} : vector<8x36xf32> to vector<8x4xf32>
    %76 = vector.extract_strided_slice %40 {offsets = [0, 38], sizes = [4, 286], strides = [1, 1]} : vector<4x324xf32> to vector<4x286xf32>
    %cst_24 = arith.constant dense<0.000000e+00> : vector<8x286xf32>
    %77 = tpu.matmul %75, %76, %cst_24 {dimension_numbers = #tpu.dot_dimension_numbers<[1], [0], [0], [1], [0, 0, 1, 1], [], []>} : vector<8x4xf32>, vector<4x286xf32>, vector<8x286xf32> -> vector<8x286xf32>
    %78 = arith.addf %74, %77 : vector<8x286xf32>
    %79 = vector.broadcast %38 : vector<1x1xf32> to vector<8x286xf32>
    %80 = arith.mulf %78, %79 : vector<8x286xf32>
    %c0_25 = arith.constant 0 : index
    %c0_26 = arith.constant 0 : index
    %81 = vector.load %arg5[%c0_25, %c0_26] : memref<8x1xf32, #tpu.memory_space<vmem>>, vector<8x1xf32>
    %82 = vector.broadcast %81 : vector<8x1xf32> to vector<8x286xf32>
    %83 = arith.addf %80, %82 : vector<8x286xf32>
    %84 = vector.extract_strided_slice %83 {offsets = [0, 0], sizes = [8, 16], strides = [1, 1]} : vector<8x286xf32> to vector<8x16xf32>
    %c0_27 = arith.constant 0 : index
    %c0_28 = arith.constant 0 : index
    %c0_29 = arith.constant 0 : index
    %85 = vector.load %arg6[%c0_27, %c0_28, %c0_29] : memref<1x8x256xf32, #tpu.memory_space<vmem>>, vector<1x8x16xf32>
    %86 = vector.shape_cast %85 : vector<1x8x16xf32> to vector<8x16xf32>
    %87 = vector.shape_cast %84 : vector<8x16xf32> to vector<1x8x16xf32>
    tpu.vector_store %arg6[%c0_27, %c0_28, %c0_29], %87 {strides = array<i32>} : memref<1x8x256xf32, #tpu.memory_space<vmem>>, vector<1x8x16xf32>,
    %88 = vector.extract_strided_slice %83 {offsets = [0, 18], sizes = [8, 16], strides = [1, 1]} : vector<8x286xf32> to vector<8x16xf32>
    %c0_30 = arith.constant 0 : index
    %c0_31 = arith.constant 0 : index
    %c16 = arith.constant 16 : index
    %89 = vector.load %arg6[%c0_30, %c0_31, %c16] : memref<1x8x256xf32, #tpu.memory_space<vmem>>, vector<1x8x16xf32>
    %90 = vector.shape_cast %89 : vector<1x8x16xf32> to vector<8x16xf32>
    %91 = vector.shape_cast %88 : vector<8x16xf32> to vector<1x8x16xf32>
    tpu.vector_store %arg6[%c0_30, %c0_31, %c16], %91 {strides = array<i32>} : memref<1x8x256xf32, #tpu.memory_space<vmem>>, vector<1x8x16xf32>,
    %92 = vector.extract_strided_slice %83 {offsets = [0, 36], sizes = [8, 16], strides = [1, 1]} : vector<8x286xf32> to vector<8x16xf32>
    %c0_32 = arith.constant 0 : index
    %c0_33 = arith.constant 0 : index
    %c32 = arith.constant 32 : index
    %93 = vector.load %arg6[%c0_32, %c0_33, %c32] : memref<1x8x256xf32, #tpu.memory_space<vmem>>, vector<1x8x16xf32>
    %94 = vector.shape_cast %93 : vector<1x8x16xf32> to vector<8x16xf32>
    %95 = vector.shape_cast %92 : vector<8x16xf32> to vector<1x8x16xf32>
    tpu.vector_store %arg6[%c0_32, %c0_33, %c32], %95 {strides = array<i32>} : memref<1x8x256xf32, #tpu.memory_space<vmem>>, vector<1x8x16xf32>,
    %96 = vector.extract_strided_slice %83 {offsets = [0, 54], sizes = [8, 16], strides = [1, 1]} : vector<8x286xf32> to vector<8x16xf32>
    %c0_34 = arith.constant 0 : index
    %c0_35 = arith.constant 0 : index
    %c48 = arith.constant 48 : index
    %97 = vector.load %arg6[%c0_34, %c0_35, %c48] : memref<1x8x256xf32, #tpu.memory_space<vmem>>, vector<1x8x16xf32>
    %98 = vector.shape_cast %97 : vector<1x8x16xf32> to vector<8x16xf32>
    %99 = vector.shape_cast %96 : vector<8x16xf32> to vector<1x8x16xf32>
    tpu.vector_store %arg6[%c0_34, %c0_35, %c48], %99 {strides = array<i32>} : memref<1x8x256xf32, #tpu.memory_space<vmem>>, vector<1x8x16xf32>,
    %100 = vector.extract_strided_slice %83 {offsets = [0, 72], sizes = [8, 16], strides = [1, 1]} : vector<8x286xf32> to vector<8x16xf32>
    %c0_36 = arith.constant 0 : index
    %c0_37 = arith.constant 0 : index
    %c64 = arith.constant 64 : index
    %101 = vector.load %arg6[%c0_36, %c0_37, %c64] : memref<1x8x256xf32, #tpu.memory_space<vmem>>, vector<1x8x16xf32>
    %102 = vector.shape_cast %101 : vector<1x8x16xf32> to vector<8x16xf32>
    %103 = vector.shape_cast %100 : vector<8x16xf32> to vector<1x8x16xf32>
    tpu.vector_store %arg6[%c0_36, %c0_37, %c64], %103 {strides = array<i32>} : memref<1x8x256xf32, #tpu.memory_space<vmem>>, vector<1x8x16xf32>,
    %104 = vector.extract_strided_slice %83 {offsets = [0, 90], sizes = [8, 16], strides = [1, 1]} : vector<8x286xf32> to vector<8x16xf32>
    %c0_38 = arith.constant 0 : index
    %c0_39 = arith.constant 0 : index
    %c80 = arith.constant 80 : index
    %105 = vector.load %arg6[%c0_38, %c0_39, %c80] : memref<1x8x256xf32, #tpu.memory_space<vmem>>, vector<1x8x16xf32>
    %106 = vector.shape_cast %105 : vector<1x8x16xf32> to vector<8x16xf32>
    %107 = vector.shape_cast %104 : vector<8x16xf32> to vector<1x8x16xf32>
    tpu.vector_store %arg6[%c0_38, %c0_39, %c80], %107 {strides = array<i32>} : memref<1x8x256xf32, #tpu.memory_space<vmem>>, vector<1x8x16xf32>,
    %108 = vector.extract_strided_slice %83 {offsets = [0, 108], sizes = [8, 16], strides = [1, 1]} : vector<8x286xf32> to vector<8x16xf32>
    %c0_40 = arith.constant 0 : index
    %c0_41 = arith.constant 0 : index
    %c96 = arith.constant 96 : index
    %109 = vector.load %arg6[%c0_40, %c0_41, %c96] : memref<1x8x256xf32, #tpu.memory_space<vmem>>, vector<1x8x16xf32>
    %110 = vector.shape_cast %109 : vector<1x8x16xf32> to vector<8x16xf32>
    %111 = vector.shape_cast %108 : vector<8x16xf32> to vector<1x8x16xf32>
    tpu.vector_store %arg6[%c0_40, %c0_41, %c96], %111 {strides = array<i32>} : memref<1x8x256xf32, #tpu.memory_space<vmem>>, vector<1x8x16xf32>,
    %112 = vector.extract_strided_slice %83 {offsets = [0, 126], sizes = [8, 16], strides = [1, 1]} : vector<8x286xf32> to vector<8x16xf32>
    %c0_42 = arith.constant 0 : index
    %c0_43 = arith.constant 0 : index
    %c112 = arith.constant 112 : index
    %113 = vector.load %arg6[%c0_42, %c0_43, %c112] : memref<1x8x256xf32, #tpu.memory_space<vmem>>, vector<1x8x16xf32>
    %114 = vector.shape_cast %113 : vector<1x8x16xf32> to vector<8x16xf32>
    %115 = vector.shape_cast %112 : vector<8x16xf32> to vector<1x8x16xf32>
    tpu.vector_store %arg6[%c0_42, %c0_43, %c112], %115 {strides = array<i32>} : memref<1x8x256xf32, #tpu.memory_space<vmem>>, vector<1x8x16xf32>,
    %116 = vector.extract_strided_slice %83 {offsets = [0, 144], sizes = [8, 16], strides = [1, 1]} : vector<8x286xf32> to vector<8x16xf32>
    %c0_44 = arith.constant 0 : index
    %c0_45 = arith.constant 0 : index
    %c128 = arith.constant 128 : index
    %117 = vector.load %arg6[%c0_44, %c0_45, %c128] : memref<1x8x256xf32, #tpu.memory_space<vmem>>, vector<1x8x16xf32>
    %118 = vector.shape_cast %117 : vector<1x8x16xf32> to vector<8x16xf32>
    %119 = vector.shape_cast %116 : vector<8x16xf32> to vector<1x8x16xf32>
    tpu.vector_store %arg6[%c0_44, %c0_45, %c128], %119 {strides = array<i32>} : memref<1x8x256xf32, #tpu.memory_space<vmem>>, vector<1x8x16xf32>,
    %120 = vector.extract_strided_slice %83 {offsets = [0, 162], sizes = [8, 16], strides = [1, 1]} : vector<8x286xf32> to vector<8x16xf32>
    %c0_46 = arith.constant 0 : index
    %c0_47 = arith.constant 0 : index
    %c144 = arith.constant 144 : index
    %121 = vector.load %arg6[%c0_46, %c0_47, %c144] : memref<1x8x256xf32, #tpu.memory_space<vmem>>, vector<1x8x16xf32>
    %122 = vector.shape_cast %121 : vector<1x8x16xf32> to vector<8x16xf32>
    %123 = vector.shape_cast %120 : vector<8x16xf32> to vector<1x8x16xf32>
    tpu.vector_store %arg6[%c0_46, %c0_47, %c144], %123 {strides = array<i32>} : memref<1x8x256xf32, #tpu.memory_space<vmem>>, vector<1x8x16xf32>,
    %124 = vector.extract_strided_slice %83 {offsets = [0, 180], sizes = [8, 16], strides = [1, 1]} : vector<8x286xf32> to vector<8x16xf32>
    %c0_48 = arith.constant 0 : index
    %c0_49 = arith.constant 0 : index
    %c160 = arith.constant 160 : index
    %125 = vector.load %arg6[%c0_48, %c0_49, %c160] : memref<1x8x256xf32, #tpu.memory_space<vmem>>, vector<1x8x16xf32>
    %126 = vector.shape_cast %125 : vector<1x8x16xf32> to vector<8x16xf32>
    %127 = vector.shape_cast %124 : vector<8x16xf32> to vector<1x8x16xf32>
    tpu.vector_store %arg6[%c0_48, %c0_49, %c160], %127 {strides = array<i32>} : memref<1x8x256xf32, #tpu.memory_space<vmem>>, vector<1x8x16xf32>,
    %128 = vector.extract_strided_slice %83 {offsets = [0, 198], sizes = [8, 16], strides = [1, 1]} : vector<8x286xf32> to vector<8x16xf32>
    %c0_50 = arith.constant 0 : index
    %c0_51 = arith.constant 0 : index
    %c176 = arith.constant 176 : index
    %129 = vector.load %arg6[%c0_50, %c0_51, %c176] : memref<1x8x256xf32, #tpu.memory_space<vmem>>, vector<1x8x16xf32>
    %130 = vector.shape_cast %129 : vector<1x8x16xf32> to vector<8x16xf32>
    %131 = vector.shape_cast %128 : vector<8x16xf32> to vector<1x8x16xf32>
    tpu.vector_store %arg6[%c0_50, %c0_51, %c176], %131 {strides = array<i32>} : memref<1x8x256xf32, #tpu.memory_space<vmem>>, vector<1x8x16xf32>,
    %132 = vector.extract_strided_slice %83 {offsets = [0, 216], sizes = [8, 16], strides = [1, 1]} : vector<8x286xf32> to vector<8x16xf32>
    %c0_52 = arith.constant 0 : index
    %c0_53 = arith.constant 0 : index
    %c192 = arith.constant 192 : index
    %133 = vector.load %arg6[%c0_52, %c0_53, %c192] : memref<1x8x256xf32, #tpu.memory_space<vmem>>, vector<1x8x16xf32>
    %134 = vector.shape_cast %133 : vector<1x8x16xf32> to vector<8x16xf32>
    %135 = vector.shape_cast %132 : vector<8x16xf32> to vector<1x8x16xf32>
    tpu.vector_store %arg6[%c0_52, %c0_53, %c192], %135 {strides = array<i32>} : memref<1x8x256xf32, #tpu.memory_space<vmem>>, vector<1x8x16xf32>,
    %136 = vector.extract_strided_slice %83 {offsets = [0, 234], sizes = [8, 16], strides = [1, 1]} : vector<8x286xf32> to vector<8x16xf32>
    %c0_54 = arith.constant 0 : index
    %c0_55 = arith.constant 0 : index
    %c208 = arith.constant 208 : index
    %137 = vector.load %arg6[%c0_54, %c0_55, %c208] : memref<1x8x256xf32, #tpu.memory_space<vmem>>, vector<1x8x16xf32>
    %138 = vector.shape_cast %137 : vector<1x8x16xf32> to vector<8x16xf32>
    %139 = vector.shape_cast %136 : vector<8x16xf32> to vector<1x8x16xf32>
    tpu.vector_store %arg6[%c0_54, %c0_55, %c208], %139 {strides = array<i32>} : memref<1x8x256xf32, #tpu.memory_space<vmem>>, vector<1x8x16xf32>,
    %140 = vector.extract_strided_slice %83 {offsets = [0, 252], sizes = [8, 16], strides = [1, 1]} : vector<8x286xf32> to vector<8x16xf32>
    %c0_56 = arith.constant 0 : index
    %c0_57 = arith.constant 0 : index
    %c224 = arith.constant 224 : index
    %141 = vector.load %arg6[%c0_56, %c0_57, %c224] : memref<1x8x256xf32, #tpu.memory_space<vmem>>, vector<1x8x16xf32>
    %142 = vector.shape_cast %141 : vector<1x8x16xf32> to vector<8x16xf32>
    %143 = vector.shape_cast %140 : vector<8x16xf32> to vector<1x8x16xf32>
    tpu.vector_store %arg6[%c0_56, %c0_57, %c224], %143 {strides = array<i32>} : memref<1x8x256xf32, #tpu.memory_space<vmem>>, vector<1x8x16xf32>,
    %144 = vector.extract_strided_slice %83 {offsets = [0, 270], sizes = [8, 16], strides = [1, 1]} : vector<8x286xf32> to vector<8x16xf32>
    %c0_58 = arith.constant 0 : index
    %c0_59 = arith.constant 0 : index
    %c240 = arith.constant 240 : index
    %145 = vector.load %arg6[%c0_58, %c0_59, %c240] : memref<1x8x256xf32, #tpu.memory_space<vmem>>, vector<1x8x16xf32>
    %146 = vector.shape_cast %145 : vector<1x8x16xf32> to vector<8x16xf32>
    %147 = vector.shape_cast %144 : vector<8x16xf32> to vector<1x8x16xf32>
    tpu.vector_store %arg6[%c0_58, %c0_59, %c240], %147 {strides = array<i32>} : memref<1x8x256xf32, #tpu.memory_space<vmem>>, vector<1x8x16xf32>,
    %c0_60 = arith.constant 0 : index
    %c0_61 = arith.constant 0 : index
    %c0_62 = arith.constant 0 : index
    %148 = vector.load %arg7[%c0_60, %c0_61, %c0_62] : memref<1x8x1xf32, #tpu.memory_space<vmem>>, vector<1x8x1xf32>
    %149 = vector.shape_cast %148 : vector<1x8x1xf32> to vector<8x1xf32>
    %150 = vector.shape_cast %27 : vector<8x1xf32> to vector<1x8x1xf32>
    tpu.vector_store %arg7[%c0_60, %c0_61, %c0_62], %150 {strides = array<i32>} : memref<1x8x1xf32, #tpu.memory_space<vmem>>, vector<1x8x1xf32>,
    %c0_63 = arith.constant 0 : index
    %c0_64 = arith.constant 0 : index
    %c0_65 = arith.constant 0 : index
    %151 = vector.load %arg8[%c0_63, %c0_64, %c0_65] : memref<1x1x36xf32, #tpu.memory_space<vmem>>, vector<1x1x36xf32>
    %152 = vector.shape_cast %151 : vector<1x1x36xf32> to vector<1x36xf32>
    %153 = vector.shape_cast %14 : vector<1x36xf32> to vector<1x1x36xf32>
    tpu.vector_store %arg8[%c0_63, %c0_64, %c0_65], %153 {strides = array<i32>} : memref<1x1x36xf32, #tpu.memory_space<vmem>>, vector<1x1x36xf32>,
    return
  }
  func.func @transform_0(%arg0: i32) -> (i32, i32) {
    %c0_i32 = arith.constant 0 : i32
    %c0_i32_0 = arith.constant 0 : i32
    %c0_i32_1 = arith.constant 0 : i32
    return %c0_i32, %c0_i32_0 : i32, i32
  }
  func.func @transform_1(%arg0: i32) -> (i32, i32) {
    %c0_i32 = arith.constant 0 : i32
    %c0_i32_0 = arith.constant 0 : i32
    %c0_i32_1 = arith.constant 0 : i32
    return %c0_i32, %c0_i32_0 : i32, i32
  }
  func.func @transform_2(%arg0: i32) -> (i32, i32) {
    %c0_i32 = arith.constant 0 : i32
    %c0_i32_0 = arith.constant 0 : i32
    %c0_i32_1 = arith.constant 0 : i32
    return %c0_i32, %c0_i32_0 : i32, i32
  }
  func.func @transform_3(%arg0: i32) -> (i32, i32, i32) {
    %c0_i32 = arith.constant 0 : i32
    %c0_i32_0 = arith.constant 0 : i32
    %c0_i32_1 = arith.constant 0 : i32
    return %arg0, %c0_i32, %c0_i32_0 : i32, i32, i32
  }
  func.func @transform_4(%arg0: i32) -> (i32, i32) {
    %c0_i32 = arith.constant 0 : i32
    %c0_i32_0 = arith.constant 0 : i32
    %c0_i32_1 = arith.constant 0 : i32
    return %c0_i32, %c0_i32_0 : i32, i32
  }
  func.func @transform_5(%arg0: i32) -> (i32, i32, i32) {
    %c0_i32 = arith.constant 0 : i32
    %c0_i32_0 = arith.constant 0 : i32
    %c0_i32_1 = arith.constant 0 : i32
    return %arg0, %c0_i32, %c0_i32_0 : i32, i32, i32
  }
  func.func @transform_6(%arg0: i32) -> (i32, i32, i32) {
    %c0_i32 = arith.constant 0 : i32
    %c0_i32_0 = arith.constant 0 : i32
    %c0_i32_1 = arith.constant 0 : i32
    return %arg0, %c0_i32, %c0_i32_0 : i32, i32, i32
  }
  func.func @transform_7(%arg0: i32) -> (i32, i32, i32) {
    %c0_i32 = arith.constant 0 : i32
    %c0_i32_0 = arith.constant 0 : i32
    %c0_i32_1 = arith.constant 0 : i32
    return %arg0, %c0_i32, %c0_i32_0 : i32, i32, i32
  }
}

</mosaic_0001>

<llo_original>
// kernel: tpu_custom_call.1
$region0: #{tpu_custom_call.1}
  #allocation0 [shape = 'u32[]', space=smem, size = 0x4, offset = 0x4, fixed_abs, tag = 'smem constant byte address 0x4 - core index']
  #allocation1 [shape = 'u32[72,128]{1,0:T(1,128)}', space=vmem, size = 0x9000, scoped, tag = 'internal scratch']
  %s0 = inlined_call_operand.vmem [shape: f32[8,36], index: 0, kind: input, shape index: {}]
  %s1 = inlined_call_operand.vmem [shape: f32[8,36], index: 1, kind: input, shape index: {}]
  %s2 = inlined_call_operand.vmem [shape: f32[8,1], index: 2, kind: input, shape index: {}]
  %s3 = inlined_call_operand.hbm [shape: f32[2,4,324], index: 3, kind: input, shape index: {}]
  %s4 = inlined_call_operand.vmem [shape: f32[8,1], index: 4, kind: input, shape index: {}]
  %s5 = inlined_call_operand.hbm [shape: f32[2,8,256], index: 5, kind: output, shape index: {0}]
  %s6 = inlined_call_operand.vmem [shape: f32[2,8,1], index: 6, kind: output, shape index: {1}]
  %s7 = inlined_call_operand.hbm [shape: f32[2,1,36], index: 7, kind: output, shape index: {2}]
  %8 = xla_tuple %s5, %s6, %s7
  %s9 = sld [smem:[#allocation0]]
  $region73: #{tpu_custom_call.1} parent=0
    _
  %s11 = ssub.s32 1, %s9
  %s12 = scalar_select 0, %s11, %s9
  $region1: #{tpu_custom_call.1} parent=0
    #allocation2 [shape = 'u8[12288]{0}', space=vmem, size = 0x3000, scoped, tag = 'input window, operand 3']
    #allocation3 [shape = 's32[2]{0}', space=sflag, size = 0x8, scoped, tag = 'scoped memory for tpu_custom_call.1']
    #allocation4 [shape = 's32[2]{0}', space=sflag, size = 0x8, scoped, tag = 'scoped memory for tpu_custom_call.1']
    #allocation5 [shape = 'u8[16384]{0}', space=vmem, size = 0x4000, scoped, tag = 'output window, operand 0']
    #allocation6 [shape = 'u8[1024]{0}', space=vmem, size = 0x400, scoped, tag = 'output window, operand 2']
    #allocation7 [shape = 's32[2]{0}', space=sflag, size = 0x8, scoped, tag = 'scoped memory for tpu_custom_call.1']
    %13 = vsyncpa [#allocation3], 0
    %s14 = scalar_lea.sflag [#allocation3], 1
    %15 = vsyncpa %s14, 0
    %16 = vsyncpa [#allocation4], 0
    %s17 = scalar_lea.sflag [#allocation4], 1
    %18 = vsyncpa %s17, 0
    %19 = vsyncpa [#allocation7], 0
    %s20 = scalar_lea.sflag [#allocation7], 1
    %21 = vsyncpa %s20, 0
    loop: start=0, step=1, limit=4
    $region2: #{tpu_custom_call.1} parent=1 // loop_pre_header
      _
    $region3: #{tpu_custom_call.1} parent=1 // loop_header
      %s23 = sphi 0, %s27
      %p24 = scmp.ge.s32.totalorder %s23, 4
      %s31 = sphi 0, %s31
      %s33 = sphi 0, %s31
      %s34 = sphi 0, %s33
      %s48 = sphi 0, %s34
      %s52 = sphi 0, %s52
      %s54 = sphi 0, %s52
      %s55 = sphi 0, %s54
      %s69 = sphi 0, %s55
      %s73 = sphi 0, %s73
      %s75 = sphi 0, %s73
      %s76 = sphi 0, %s75
      %s90 = sphi 0, %s76
      %s96 = sphi 0, %s98
      %s99 = sphi 0, %s96
      %s100 = sphi 0, %s99
      %s116 = sphi 0, %s100
      %s120 = sphi 0, %s120
      %s122 = sphi 0, %s120
      %s123 = sphi 0, %s122
      %s137 = sphi 0, %s123
      %s143 = sphi 0, %s145
      %s146 = sphi 0, %s143
      %s147 = sphi 0, %s146
      %s163 = sphi 0, %s147
      %s169 = sphi 0, %s171
      %s172 = sphi 0, %s169
      %s173 = sphi 0, %s172
      %s189 = sphi 0, %s173
      %s195 = sphi 0, %s197
      %s198 = sphi 0, %s195
      %s199 = sphi 0, %s198
      %s215 = sphi 0, %s199
    $region4: #{tpu_custom_call.1} parent=1 // loop_header_branch
      %26 = sbr.rel (%p24) target = $region8
    $region5: #{tpu_custom_call.1} parent=1 // loop_body
      %s28 = ssub.s32 %s23, 1
      %s29 = ssub.s32 %s23, 2
      %s30 = sadd.s32 %s23, 1
      %s32 = sadd.s32 %s31, 1
      %p35 = scmp.eq.s32.totalorder %s23, 1
      %p36 = scmp.ne.s32.totalorder %s31, %s33
      %p37 = scmp.eq.s32.totalorder %s23, 0
      %p38 = por %p36, %p37
      %p39 = scmp.ne.s32.totalorder %s31, %s33
      %p40 = scmp.eq.s32.totalorder %s28, 1
      %p41 = por %p39, %p40
      %p42 = scmp.ne.s32.totalorder %s33, %s34
      %p43 = scmp.eq.s32.totalorder %s28, 0
      %p44 = por %p42, %p43
      %p45 = scmp.ne.s32.totalorder %s33, %s34
      %p46 = scmp.eq.s32.totalorder %s29, 1
      %p47 = por %p45, %p46
      %p49 = scmp.ne.s32.totalorder %s34, %s48
      %p50 = scmp.eq.s32.totalorder %s29, 0
      %p51 = por %p49, %p50
      %s53 = sadd.s32 %s52, 1
      %p56 = scmp.eq.s32.totalorder %s23, 1
      %p57 = scmp.ne.s32.totalorder %s52, %s54
      %p58 = scmp.eq.s32.totalorder %s23, 0
      %p59 = por %p57, %p58
      %p60 = scmp.ne.s32.totalorder %s52, %s54
      %p61 = scmp.eq.s32.totalorder %s28, 1
      %p62 = por %p60, %p61
      %p63 = scmp.ne.s32.totalorder %s54, %s55
      %p64 = scmp.eq.s32.totalorder %s28, 0
      %p65 = por %p63, %p64
      %p66 = scmp.ne.s32.totalorder %s54, %s55
      %p67 = scmp.eq.s32.totalorder %s29, 1
      %p68 = por %p66, %p67
      %p70 = scmp.ne.s32.totalorder %s55, %s69
      %p71 = scmp.eq.s32.totalorder %s29, 0
      %p72 = por %p70, %p71
      %s74 = sadd.s32 %s73, 1
      %p77 = scmp.eq.s32.totalorder %s23, 1
      %p78 = scmp.ne.s32.totalorder %s73, %s75
      %p79 = scmp.eq.s32.totalorder %s23, 0
      %p80 = por %p78, %p79
      %p81 = scmp.ne.s32.totalorder %s73, %s75
      %p82 = scmp.eq.s32.totalorder %s28, 1
      %p83 = por %p81, %p82
      %p84 = scmp.ne.s32.totalorder %s75, %s76
      %p85 = scmp.eq.s32.totalorder %s28, 0
      %p86 = por %p84, %p85
      %p87 = scmp.ne.s32.totalorder %s75, %s76
      %p88 = scmp.eq.s32.totalorder %s29, 1
      %p89 = por %p87, %p88
      %p91 = scmp.ne.s32.totalorder %s76, %s90
      %p92 = scmp.eq.s32.totalorder %s29, 0
      %p93 = por %p91, %p92
      %s94 = ssub.s32 %s23, %s30
      %p95 = scmp.eq.s32.totalorder %s94, 0
      %s97 = sadd.s32 %s96, 1
      %s98 = scalar_select %p95, %s96, %s97
      %p101 = pneg %p95
      %p102 = scmp.eq.s32.totalorder %s23, 1
      %p103 = por %p101, %p102
      %p104 = scmp.ne.s32.totalorder %s96, %s99
      %p105 = scmp.eq.s32.totalorder %s23, 0
      %p106 = por %p104, %p105
      %p107 = scmp.ne.s32.totalorder %s96, %s99
      %p108 = scmp.eq.s32.totalorder %s28, 1
      %p109 = por %p107, %p108
      %p110 = scmp.ne.s32.totalorder %s99, %s100
      %p111 = scmp.eq.s32.totalorder %s28, 0
      %p112 = por %p110, %p111
      %p113 = scmp.ne.s32.totalorder %s99, %s100
      %p114 = scmp.eq.s32.totalorder %s29, 1
      %p115 = por %p113, %p114
      %p117 = scmp.ne.s32.totalorder %s100, %s116
      %p118 = scmp.eq.s32.totalorder %s29, 0
      %p119 = por %p117, %p118
      %s121 = sadd.s32 %s120, 1
      %p124 = scmp.eq.s32.totalorder %s23, 1
      %p125 = scmp.ne.s32.totalorder %s120, %s122
      %p126 = scmp.eq.s32.totalorder %s23, 0
      %p127 = por %p125, %p126
      %p128 = scmp.ne.s32.totalorder %s120, %s122
      %p129 = scmp.eq.s32.totalorder %s28, 1
      %p130 = por %p128, %p129
      %p131 = scmp.ne.s32.totalorder %s122, %s123
      %p132 = scmp.eq.s32.totalorder %s28, 0
      %p133 = por %p131, %p132
      %p134 = scmp.ne.s32.totalorder %s122, %s123
      %p135 = scmp.eq.s32.totalorder %s29, 1
      %p136 = por %p134, %p135
      %p138 = scmp.ne.s32.totalorder %s123, %s137
      %p139 = scmp.eq.s32.totalorder %s29, 0
      %p140 = por %p138, %p139
      %s141 = ssub.s32 %s23, %s30
      %p142 = scmp.eq.s32.totalorder %s141, 0
      %s144 = sadd.s32 %s143, 1
      %s145 = scalar_select %p142, %s143, %s144
      %p148 = pneg %p142
      %p149 = scmp.eq.s32.totalorder %s23, 1
      %p150 = por %p148, %p149
      %p151 = scmp.ne.s32.totalorder %s143, %s146
      %p152 = scmp.eq.s32.totalorder %s23, 0
      %p153 = por %p151, %p152
      %p154 = scmp.ne.s32.totalorder %s143, %s146
      %p155 = scmp.eq.s32.totalorder %s28, 1
      %p156 = por %p154, %p155
      %p157 = scmp.ne.s32.totalorder %s146, %s147
      %p158 = scmp.eq.s32.totalorder %s28, 0
      %p159 = por %p157, %p158
      %p160 = scmp.ne.s32.totalorder %s146, %s147
      %p161 = scmp.eq.s32.totalorder %s29, 1
      %p162 = por %p160, %p161
      %p164 = scmp.ne.s32.totalorder %s147, %s163
      %p165 = scmp.eq.s32.totalorder %s29, 0
      %p166 = por %p164, %p165
      %s167 = ssub.s32 %s23, %s30
      %p168 = scmp.eq.s32.totalorder %s167, 0
      %s170 = sadd.s32 %s169, 1
      %s171 = scalar_select %p168, %s169, %s170
      %p174 = pneg %p168
      %p175 = scmp.eq.s32.totalorder %s23, 1
      %p176 = por %p174, %p175
      %p177 = scmp.ne.s32.totalorder %s169, %s172
      %p178 = scmp.eq.s32.totalorder %s23, 0
      %p179 = por %p177, %p178
      %p180 = scmp.ne.s32.totalorder %s169, %s172
      %p181 = scmp.eq.s32.totalorder %s28, 1
      %p182 = por %p180, %p181
      %p183 = scmp.ne.s32.totalorder %s172, %s173
      %p184 = scmp.eq.s32.totalorder %s28, 0
      %p185 = por %p183, %p184
      %p186 = scmp.ne.s32.totalorder %s172, %s173
      %p187 = scmp.eq.s32.totalorder %s29, 1
      %p188 = por %p186, %p187
      %p190 = scmp.ne.s32.totalorder %s173, %s189
      %p191 = scmp.eq.s32.totalorder %s29, 0
      %p192 = por %p190, %p191
      %s193 = ssub.s32 %s23, %s30
      %p194 = scmp.eq.s32.totalorder %s193, 0
      %s196 = sadd.s32 %s195, 1
      %s197 = scalar_select %p194, %s195, %s196
      %p200 = pneg %p194
      %p201 = scmp.eq.s32.totalorder %s23, 1
      %p202 = por %p200, %p201
      %p203 = scmp.ne.s32.totalorder %s195, %s198
      %p204 = scmp.eq.s32.totalorder %s23, 0
      %p205 = por %p203, %p204
      %p206 = scmp.ne.s32.totalorder %s195, %s198
      %p207 = scmp.eq.s32.totalorder %s28, 1
      %p208 = por %p206, %p207
      %p209 = scmp.ne.s32.totalorder %s198, %s199
      %p210 = scmp.eq.s32.totalorder %s28, 0
      %p211 = por %p209, %p210
      %p212 = scmp.ne.s32.totalorder %s198, %s199
      %p213 = scmp.eq.s32.totalorder %s29, 1
      %p214 = por %p212, %p213
      %p216 = scmp.ne.s32.totalorder %s199, %s215
      %p217 = scmp.eq.s32.totalorder %s29, 0
      %p218 = por %p216, %p217
      %p219 = scmp.le.s32.totalorder 1, %s23
      %p220 = scmp.lt.s32.totalorder %s23, 3
      %p221 = pnand %p219, %p220
      %p222 = pneg %p221
      // Predicated region
      $region9: #{tpu_custom_call.1} parent=5 // pred_check
        _
      $region10: #{tpu_custom_call.1} parent=5 // pred_check_branch
        %224 = sbr.rel (%p221) target = $region12
      $region11: #{tpu_custom_call.1} parent=5 // pred_region
        %s225 = ssub.s32 %s23, 1
        // Predicated region
        $region13: #{tpu_custom_call.1} parent=11 // pred_check
          %p226 = pneg %p44
        $region14: #{tpu_custom_call.1} parent=11 // pred_check_branch
          %228 = sbr.rel (%p226) target = $region16
        $region15: #{tpu_custom_call.1} parent=11 // pred_region
          _
        $region16: #{tpu_custom_call.1} parent=11 // pred_fallthru
          _
        // Predicated region
        $region17: #{tpu_custom_call.1} parent=11 // pred_check
          %p229 = pneg %p65
        $region18: #{tpu_custom_call.1} parent=11 // pred_check_branch
          %231 = sbr.rel (%p229) target = $region20
        $region19: #{tpu_custom_call.1} parent=11 // pred_region
          _
        $region20: #{tpu_custom_call.1} parent=11 // pred_fallthru
          _
        // Predicated region
        $region21: #{tpu_custom_call.1} parent=11 // pred_check
          %p232 = pneg %p86
        $region22: #{tpu_custom_call.1} parent=11 // pred_check_branch
          %234 = sbr.rel (%p232) target = $region24
        $region23: #{tpu_custom_call.1} parent=11 // pred_region
          _
        $region24: #{tpu_custom_call.1} parent=11 // pred_fallthru
          _
        // Predicated region
        $region25: #{tpu_custom_call.1} parent=11 // pred_check
          %p235 = pneg %p133
        $region26: #{tpu_custom_call.1} parent=11 // pred_check_branch
          %237 = sbr.rel (%p235) target = $region28
        $region27: #{tpu_custom_call.1} parent=11 // pred_region
          _
        $region28: #{tpu_custom_call.1} parent=11 // pred_fallthru
          _
      $region12: #{tpu_custom_call.1} parent=5 // pred_fallthru
        _
      %p238 = scmp.lt.s32.totalorder %s23, 2
      // Predicated region
      $region29: #{tpu_custom_call.1} parent=5 // pred_check
        %p239 = pneg %p238
      $region30: #{tpu_custom_call.1} parent=5 // pred_check_branch
        %241 = sbr.rel (%p239) target = $region32
      $region31: #{tpu_custom_call.1} parent=5 // pred_region
        // Predicated region
        $region33: #{tpu_custom_call.1} parent=31 // pred_check
          %p242 = pneg %p106
        $region34: #{tpu_custom_call.1} parent=31 // pred_check_branch
          %244 = sbr.rel (%p242) target = $region36
        $region35: #{tpu_custom_call.1} parent=31 // pred_region
          %s245 = sand.u32 %s96, 1
          %s246 = scalar_lea.sflag [#allocation3], %s245
          %s247 = sand.u32 %s96, 1
          %s248 = smul.addr %s247, 12
          %s249 = scalar_lea.vmem [#allocation2], %s248
          %251 = vsyncadd %s246, 0
          %s252 = smul.addr %s23, 3
          %s253 = smul.addr %s252, 4
          %s254 = scalar_lea.hbm %s3, %s253
          %s256 = sshll.u32 %s254, 4
          %s257 = int_to_ptr.hbm [resolvable:$true] %s256
          %s258 = sshll.u32 %s249, 4
          %s259 = int_to_ptr.vmem [resolvable:$true] %s258
          %261 = dma.hbm_to_vmem [thread:$0]  %s257, 192, %s259, %s246
        $region36: #{tpu_custom_call.1} parent=31 // pred_fallthru
          _
      $region32: #{tpu_custom_call.1} parent=5 // pred_fallthru
        _
      %p262 = scmp.le.s32.totalorder 1, %s23
      %p263 = scmp.lt.s32.totalorder %s23, 3
      %p264 = pnand %p262, %p263
      %p265 = pneg %p264
      // Predicated region
      $region37: #{tpu_custom_call.1} parent=5 // pred_check
        _
      $region38: #{tpu_custom_call.1} parent=5 // pred_check_branch
        %267 = sbr.rel (%p264) target = $region40
      $region39: #{tpu_custom_call.1} parent=5 // pred_region
        %s268 = ssub.s32 %s23, 1
        %s269 = sand.u32 %s99, 1
        %s270 = scalar_lea.sflag [#allocation3], %s269
        %s271 = sand.u32 %s99, 1
        %s272 = smul.addr %s271, 12
        %s273 = scalar_lea.vmem [#allocation2], %s272
        // Predicated region
        $region41: #{tpu_custom_call.1} parent=39 // pred_check
          %p274 = pneg %p112
        $region42: #{tpu_custom_call.1} parent=39 // pred_check_branch
          %276 = sbr.rel (%p274) target = $region44
        $region43: #{tpu_custom_call.1} parent=39 // pred_region
          %278 = dma.done %s270, 192
        $region44: #{tpu_custom_call.1} parent=39 // pred_fallthru
          _
        %p279 = pneg %p44
        %p280 = pneg %p41
        %p281 = pneg %p65
        %p282 = pneg %p62
        %p283 = pneg %p86
        %p284 = pneg %p83
        %s285 = sand.u32 %s99, 1
        %s286 = scalar_lea.sflag [#allocation3], %s285
        %s287 = sand.u32 %s99, 1
        %s288 = smul.addr %s287, 12
        %s289 = scalar_lea.vmem [#allocation2], %s288
        %p290 = pneg %p112
        %p291 = pneg %p109
        %p292 = pneg %p133
        %p293 = pneg %p130
        %p294 = pneg %p159
        %p295 = pneg %p156
        %s296 = sand.u32 %s146, 1
        %s297 = scalar_lea.sflag [#allocation4], %s296
        %s298 = sand.u32 %s146, 1
        %s299 = smul.addr %s298, 16
        %s300 = scalar_lea.vmem [#allocation5], %s299
        %p301 = pneg %p185
        %p302 = pneg %p182
        %p303 = scmp.lt.s32.totalorder %s28, 1
        %s304 = scalar_select %p303, %s28, 1
        %s305 = smul.addr %s304, 8
        %s306 = scalar_lea.vmem %s6, %s305
        %p307 = pneg %p211
        %p308 = pneg %p208
        %s309 = sand.u32 %s198, 1
        %s310 = scalar_lea.sflag [#allocation7], %s309
        %s311 = sand.u32 %s198, 1
        %s312 = scalar_lea.vmem [#allocation6], %s311
        %p313 = scmp.lt.s32.totalorder %s28, 1
        %s314 = scalar_select %p313, %s28, 1
        %s315 = smul.addr %s314, 8
        %s316 = scalar_lea.vmem %s6, %s315
        %v317 = vld [vmem:[%s0] sm:$0xff]
        %v318 = vld [vmem:[%s2] sm:$0xff]
        %320 = vset.pattern.permute.xlu0 0
        %321 = vperm.xlu0 %320, %v318
        %v322 = vpop.permute.xlu0 %321
        %v324 = vmul.f32 %v317, %v322
        %vm325 = vcmask 293888
        %v326 = vsel %vm325, %v324, 0.0
        %v327 = vrot.slane %v326, 4
        %v328 = vadd.f32 %v326, %v327
        %v329 = vrot.slane %v328, 2
        %v330 = vadd.f32 %v328, %v329
        %v331 = vrot.slane %v330, 1
        %v332 = vadd.f32 %v330, %v331
        %v333 = vmul.f32 %v332, %v332
        %vm334 = vcmask 286720
        %v335 = vsel %vm334, %v333, 0.0
        %336 = vadd.xlane.f32.xlu0 %v335
        %v337 = vpop.xlane.xlu0 %336
        %v338 = vrot.slane %v337, 4
        %v339 = vadd.f32 %v337, %v338
        %v340 = vrot.slane %v339, 2
        %v341 = vadd.f32 %v339, %v340
        %v342 = vrot.slane %v341, 1
        %v343 = vadd.f32 %v341, %v342
        %s344 = vtos %v343
        %v345 = vstv %s344
        %v346 = vrsqrt.pop %v345
        %v347 = vmul.f32 %v346, %v345
        %v348 = vmul.f32 %v347, %v346
        %v349 = vmul.f32 0.5, %v348
        %v350 = vsub.f32 1.5, %v349
        %v351 = vmul.f32 %v346, %v350
        %v352 = vmul.f32 %v345, %v351
        %vm353 = vcmp.eq.f32.partialorder %v345, inf
        %v354 = vsel %vm353, %v345, %v352
        %vm355 = vcmp.eq.f32.partialorder %v345, 0.0
        %v356 = vand.u32 %v345, 2147483648
        %v357 = vsel %vm355, %v356, %v354
        %s358 = vtos %v357
        %s359 = sadd.f32 %s358, 1e-12
        %v360 = vstv %s359
        %v361 = vrcp.pop %v360
        %v362 = vmul.f32 %v360, %v361
        %v363 = vsub.f32 1.0, %v362
        %v364 = vmul.f32 %v361, %v363
        %v365 = vadd.f32 %v361, %v364
        %vm366 = vweird.f32 %v360
        %vm367 = vweird.f32 %v361
        %vm368 = vmor %vm366, %vm367
        %v369 = vsel %vm368, %v361, %v365
        %v370 = vand.u32 2147483647, %v360
        %vm371 = vcmp.eq.f32.partialorder %v370, 8.507059e+37
        %v372 = vand.u32 %v360, 2147483648
        %v373 = vor.u32 1.1754944e-38, %v372
        %v374 = vsel %vm371, %v373, %v369
        %v375 = vmul.f32 %v332, %v374
        %v376 = vmul.f32 %v317, %v375
        %v377 = vsel %vm325, %v376, 0.0
        %378 = vadd.xlane.f32.xlu0 %v377
        %v379 = vpop.xlane.xlu0 %378
        %v380 = vmul.f32 %v379, %v379
        %vm381 = vcmask 7168
        %v382 = vsel %vm381, %v380, 0.0
        %383 = vadd.xlane.f32.xlu0 %v382
        %v384 = vpop.xlane.xlu0 %383
        %v385 = vrot.slane %v384, 4
        %v386 = vadd.f32 %v384, %v385
        %v387 = vrot.slane %v386, 2
        %v388 = vadd.f32 %v386, %v387
        %v389 = vrot.slane %v388, 1
        %v390 = vadd.f32 %v388, %v389
        %s391 = vtos %v390
        %v392 = vstv %s391
        %v393 = vrsqrt.pop %v392
        %v394 = vmul.f32 %v393, %v392
        %v395 = vmul.f32 %v394, %v393
        %v396 = vmul.f32 0.5, %v395
        %v397 = vsub.f32 1.5, %v396
        %v398 = vmul.f32 %v393, %v397
        %v399 = vmul.f32 %v392, %v398
        %vm400 = vcmp.eq.f32.partialorder %v392, inf
        %v401 = vsel %vm400, %v392, %v399
        %vm402 = vcmp.eq.f32.partialorder %v392, 0.0
        %v403 = vand.u32 %v392, 2147483648
        %v404 = vsel %vm402, %v403, %v401
        %s405 = vtos %v404
        %s406 = sadd.f32 %s405, 1e-12
        %v407 = vstv %s406
        %v408 = vrcp.pop %v407
        %v409 = vmul.f32 %v407, %v408
        %v410 = vsub.f32 1.0, %v409
        %v411 = vmul.f32 %v408, %v410
        %v412 = vadd.f32 %v408, %v411
        %vm413 = vweird.f32 %v407
        %vm414 = vweird.f32 %v408
        %vm415 = vmor %vm413, %vm414
        %v416 = vsel %vm415, %v408, %v412
        %v417 = vand.u32 2147483647, %v407
        %vm418 = vcmp.eq.f32.partialorder %v417, 8.507059e+37
        %v419 = vand.u32 %v407, 2147483648
        %v420 = vor.u32 1.1754944e-38, %v419
        %v421 = vsel %vm418, %v420, %v416
        %v422 = vmul.f32 %v379, %v421
        %v423 = vmul.f32 %v422, %v379
        %v424 = vsel %vm381, %v423, 0.0
        %425 = vadd.xlane.f32.xlu0 %v424
        %v426 = vpop.xlane.xlu0 %425
        %v427 = vrot.slane %v426, 4
        %v428 = vadd.f32 %v426, %v427
        %v429 = vrot.slane %v428, 2
        %v430 = vadd.f32 %v428, %v429
        %v431 = vrot.slane %v430, 1
        %v432 = vadd.f32 %v430, %v431
        %s433 = vtos %v432
        %v434 = vstv %s433
        %v435 = vrcp.pop %v434
        %v436 = vmul.f32 %v434, %v435
        %v437 = vsub.f32 2.0, %v436
        %v438 = vmul.f32 %v435, %v437
        %v439 = vld [vmem:[%s273] sm:$0xff]
        %v440 = vld [vmem:[%s273 + $0x8] sm:$0xf]
        %v441 = vld [vmem:[%s1] sm:$0xff]
        %443 = vrot.lane.b32.xlu0 %v441, 124
        %v444 = vpop.permute.xlu0 %443
        %447 = vst [vmem:[#allocation1] ss:$2 sm:$0xff] %v439
        %s448 = scalar_lea.vmem [#allocation1], 16
        %449 = vst [vmem:[%s448] ss:$2 sm:$0xff] %v440
        %v450 = vld.sshfl [vmem:[#allocation1] sm:$0xff pattern:$0x75316420]
        %v451 = vld.sshfl [vmem:[#allocation1 + $0x8] sm:$0xff pattern:$0x75316420]
        %v452 = vld.sshfl [vmem:[#allocation1 + $0x10] sm:$0xff pattern:$0x75316420]
        %453 = vrot.lane.b32.xlu0 %v450, 127
        %v454 = vpop.permute.xlu0 %453
        %455 = vrot.lane.b32.xlu0 %v451, 127
        %v456 = vpop.permute.xlu0 %455
        %457 = vrot.lane.b32.xlu0 %v452, 127
        %v458 = vpop.permute.xlu0 %457
        %vm459 = vcmask 1039360
        %v460 = vsel %vm459, %v454, %v456
        %v461 = vsel %vm459, %v456, %v458
        %vm462 = vcmask 31744
        %v463 = vsel %vm462, %v444, 0
        %vm465 = vcmask 1043456
        %v466 = vsel %vm465, %v460, 0
        %v468 = vsel %vm465, %v461, 0
        %v470 = vsel %vm465, %v458, 0
        %472 = vmatpush.msra.mxu0 0.0
        %473 = vmatpush.msra.mxu0 0.0
        %474 = vmatpush.msra.mxu0 0.0
        %475 = vmatpush.msra.mxu0 0.0
        %476 = vmatpush.msra.mxu0 0.0
        %477 = vmatpush.msra.mxu0 0.0
        %478 = vmatpush.msra.mxu0 0.0
        %479 = vmatpush.msra.mxu0 0.0
        %480 = vmatpush.msra.mxu0 0.0
        %481 = vmatpush.msra.mxu0 0.0
        %482 = vmatpush.msra.mxu0 0.0
        %483 = vmatpush.msra.mxu0 0.0
        %484 = vmatpush.msra.mxu0 0.0
        %485 = vmatpush.msra.mxu0 0.0
        %486 = vmatpush.msra.mxu0 0.0
        %487 = vmatpush.msra.mxu0 %v466
        %488 = vmatmul.f32.gmra.mxu0 %v463
        %v489 = vpop.f32.mrf.mxu0
        %v490 = vadd.f32 0.0, %v489
        %491 = vdwg.mxu0
        %492 = vmatpush.msra.mxu0 0.0
        %493 = vmatpush.msra.mxu0 0.0
        %494 = vmatpush.msra.mxu0 0.0
        %495 = vmatpush.msra.mxu0 0.0
        %496 = vmatpush.msra.mxu0 0.0
        %497 = vmatpush.msra.mxu0 0.0
        %498 = vmatpush.msra.mxu0 0.0
        %499 = vmatpush.msra.mxu0 0.0
        %500 = vmatpush.msra.mxu0 0.0
        %501 = vmatpush.msra.mxu0 0.0
        %502 = vmatpush.msra.mxu0 0.0
        %503 = vmatpush.msra.mxu0 0.0
        %504 = vmatpush.msra.mxu0 0.0
        %505 = vmatpush.msra.mxu0 0.0
        %506 = vmatpush.msra.mxu0 0.0
        %507 = vmatpush.msra.mxu0 %v468
        %508 = vmatmul.f32.gmra.mxu0 %v463
        %v509 = vpop.f32.mrf.mxu0
        %v510 = vadd.f32 0.0, %v509
        %511 = vdwg.mxu0
        %512 = vmatpush.msra.mxu0 0.0
        %513 = vmatpush.msra.mxu0 0.0
        %514 = vmatpush.msra.mxu0 0.0
        %515 = vmatpush.msra.mxu0 0.0
        %516 = vmatpush.msra.mxu0 0.0
        %517 = vmatpush.msra.mxu0 0.0
        %518 = vmatpush.msra.mxu0 0.0
        %519 = vmatpush.msra.mxu0 0.0
        %520 = vmatpush.msra.mxu0 0.0
        %521 = vmatpush.msra.mxu0 0.0
        %522 = vmatpush.msra.mxu0 0.0
        %523 = vmatpush.msra.mxu0 0.0
        %524 = vmatpush.msra.mxu0 0.0
        %525 = vmatpush.msra.mxu0 0.0
        %526 = vmatpush.msra.mxu0 0.0
        %527 = vmatpush.msra.mxu0 %v470
        %528 = vmatmul.f32.gmra.mxu0 %v463
        %v529 = vpop.f32.mrf.mxu0
        %v530 = vadd.f32 0.0, %v529
        %531 = vdwg.mxu0
        %532 = vst [vmem:[#allocation1] ss:$2 sm:$0xff] %v439
        %s533 = scalar_lea.vmem [#allocation1], 16
        %534 = vst [vmem:[%s533] ss:$2 sm:$0xff] %v440
        %v535 = vld.sshfl [vmem:[#allocation1] sm:$0xff pattern:$0x75316420]
        %v536 = vld.sshfl [vmem:[#allocation1 + $0x8] sm:$0xff pattern:$0x75316420]
        %v537 = vld.sshfl [vmem:[#allocation1 + $0x10] sm:$0xff pattern:$0x75316420]
        %v538 = vsel %vm462, %v441, 0
        %v540 = vsel %vm465, %v535, 0
        %v542 = vsel %vm465, %v536, 0
        %v544 = vsel %vm465, %v537, 0
        %546 = vmatpush.msra.mxu0 0.0
        %547 = vmatpush.msra.mxu0 0.0
        %548 = vmatpush.msra.mxu0 0.0
        %549 = vmatpush.msra.mxu0 0.0
        %550 = vmatpush.msra.mxu0 0.0
        %551 = vmatpush.msra.mxu0 0.0
        %552 = vmatpush.msra.mxu0 0.0
        %553 = vmatpush.msra.mxu0 0.0
        %554 = vmatpush.msra.mxu0 0.0
        %555 = vmatpush.msra.mxu0 0.0
        %556 = vmatpush.msra.mxu0 0.0
        %557 = vmatpush.msra.mxu0 0.0
        %558 = vmatpush.msra.mxu0 0.0
        %559 = vmatpush.msra.mxu0 0.0
        %560 = vmatpush.msra.mxu0 0.0
        %561 = vmatpush.msra.mxu0 %v540
        %562 = vmatmul.f32.gmra.mxu0 %v538
        %v563 = vpop.f32.mrf.mxu0
        %v564 = vadd.f32 %v490, %v563
        %565 = vdwg.mxu0
        %566 = vmatpush.msra.mxu0 0.0
        %567 = vmatpush.msra.mxu0 0.0
        %568 = vmatpush.msra.mxu0 0.0
        %569 = vmatpush.msra.mxu0 0.0
        %570 = vmatpush.msra.mxu0 0.0
        %571 = vmatpush.msra.mxu0 0.0
        %572 = vmatpush.msra.mxu0 0.0
        %573 = vmatpush.msra.mxu0 0.0
        %574 = vmatpush.msra.mxu0 0.0
        %575 = vmatpush.msra.mxu0 0.0
        %576 = vmatpush.msra.mxu0 0.0
        %577 = vmatpush.msra.mxu0 0.0
        %578 = vmatpush.msra.mxu0 0.0
        %579 = vmatpush.msra.mxu0 0.0
        %580 = vmatpush.msra.mxu0 0.0
        %581 = vmatpush.msra.mxu0 %v542
        %582 = vmatmul.f32.gmra.mxu0 %v538
        %v583 = vpop.f32.mrf.mxu0
        %v584 = vadd.f32 %v510, %v583
        %585 = vdwg.mxu0
        %586 = vmatpush.msra.mxu0 0.0
        %587 = vmatpush.msra.mxu0 0.0
        %588 = vmatpush.msra.mxu0 0.0
        %589 = vmatpush.msra.mxu0 0.0
        %590 = vmatpush.msra.mxu0 0.0
        %591 = vmatpush.msra.mxu0 0.0
        %592 = vmatpush.msra.mxu0 0.0
        %593 = vmatpush.msra.mxu0 0.0
        %594 = vmatpush.msra.mxu0 0.0
        %595 = vmatpush.msra.mxu0 0.0
        %596 = vmatpush.msra.mxu0 0.0
        %597 = vmatpush.msra.mxu0 0.0
        %598 = vmatpush.msra.mxu0 0.0
        %599 = vmatpush.msra.mxu0 0.0
        %600 = vmatpush.msra.mxu0 0.0
        %601 = vmatpush.msra.mxu0 %v544
        %602 = vmatmul.f32.gmra.mxu0 %v538
        %v603 = vpop.f32.mrf.mxu0
        %v604 = vadd.f32 %v530, %v603
        %605 = vdwg.mxu0
        %606 = vrot.lane.b32.xlu0 %v441, 120
        %v607 = vpop.permute.xlu0 %606
        %608 = vst [vmem:[#allocation1] ss:$2 sm:$0xff] %v439
        %s609 = scalar_lea.vmem [#allocation1], 16
        %610 = vst [vmem:[%s609] ss:$2 sm:$0xff] %v440
        %v611 = vld.sshfl [vmem:[#allocation1] sm:$0xff pattern:$0x75316420]
        %v612 = vld.sshfl [vmem:[#allocation1 + $0x8] sm:$0xff pattern:$0x75316420]
        %v613 = vld.sshfl [vmem:[#allocation1 + $0x10] sm:$0xff pattern:$0x75316420]
        %614 = vrot.lane.b32.xlu0 %v611, 126
        %v615 = vpop.permute.xlu0 %614
        %616 = vrot.lane.b32.xlu0 %v612, 126
        %v617 = vpop.permute.xlu0 %616
        %618 = vrot.lane.b32.xlu0 %v613, 126
        %v619 = vpop.permute.xlu0 %618
        %vm620 = vcmask 1031168
        %v621 = vsel %vm620, %v615, %v617
        %v622 = vsel %vm620, %v617, %v619
        %v623 = vsel %vm462, %v607, 0
        %v625 = vsel %vm465, %v621, 0
        %v627 = vsel %vm465, %v622, 0
        %v629 = vsel %vm465, %v619, 0
        %631 = vmatpush.msra.mxu0 0.0
        %632 = vmatpush.msra.mxu0 0.0
        %633 = vmatpush.msra.mxu0 0.0
        %634 = vmatpush.msra.mxu0 0.0
        %635 = vmatpush.msra.mxu0 0.0
        %636 = vmatpush.msra.mxu0 0.0
        %637 = vmatpush.msra.mxu0 0.0
        %638 = vmatpush.msra.mxu0 0.0
        %639 = vmatpush.msra.mxu0 0.0
        %640 = vmatpush.msra.mxu0 0.0
        %641 = vmatpush.msra.mxu0 0.0
        %642 = vmatpush.msra.mxu0 0.0
        %643 = vmatpush.msra.mxu0 0.0
        %644 = vmatpush.msra.mxu0 0.0
        %645 = vmatpush.msra.mxu0 0.0
        %646 = vmatpush.msra.mxu0 %v625
        %647 = vmatmul.f32.gmra.mxu0 %v623
        %v648 = vpop.f32.mrf.mxu0
        %v649 = vadd.f32 0.0, %v648
        %650 = vdwg.mxu0
        %651 = vmatpush.msra.mxu0 0.0
        %652 = vmatpush.msra.mxu0 0.0
        %653 = vmatpush.msra.mxu0 0.0
        %654 = vmatpush.msra.mxu0 0.0
        %655 = vmatpush.msra.mxu0 0.0
        %656 = vmatpush.msra.mxu0 0.0
        %657 = vmatpush.msra.mxu0 0.0
        %658 = vmatpush.msra.mxu0 0.0
        %659 = vmatpush.msra.mxu0 0.0
        %660 = vmatpush.msra.mxu0 0.0
        %661 = vmatpush.msra.mxu0 0.0
        %662 = vmatpush.msra.mxu0 0.0
        %663 = vmatpush.msra.mxu0 0.0
        %664 = vmatpush.msra.mxu0 0.0
        %665 = vmatpush.msra.mxu0 0.0
        %666 = vmatpush.msra.mxu0 %v627
        %667 = vmatmul.f32.gmra.mxu0 %v623
        %v668 = vpop.f32.mrf.mxu0
        %v669 = vadd.f32 0.0, %v668
        %670 = vdwg.mxu0
        %671 = vmatpush.msra.mxu0 0.0
        %672 = vmatpush.msra.mxu0 0.0
        %673 = vmatpush.msra.mxu0 0.0
        %674 = vmatpush.msra.mxu0 0.0
        %675 = vmatpush.msra.mxu0 0.0
        %676 = vmatpush.msra.mxu0 0.0
        %677 = vmatpush.msra.mxu0 0.0
        %678 = vmatpush.msra.mxu0 0.0
        %679 = vmatpush.msra.mxu0 0.0
        %680 = vmatpush.msra.mxu0 0.0
        %681 = vmatpush.msra.mxu0 0.0
        %682 = vmatpush.msra.mxu0 0.0
        %683 = vmatpush.msra.mxu0 0.0
        %684 = vmatpush.msra.mxu0 0.0
        %685 = vmatpush.msra.mxu0 0.0
        %686 = vmatpush.msra.mxu0 %v629
        %687 = vmatmul.f32.gmra.mxu0 %v623
        %v688 = vpop.f32.mrf.mxu0
        %v689 = vadd.f32 0.0, %v688
        %690 = vdwg.mxu0
        %v691 = vadd.f32 %v564, %v649
        %v692 = vadd.f32 %v584, %v669
        %v693 = vadd.f32 %v604, %v689
        %694 = vrot.lane.b32.xlu0 %v441, 116
        %v695 = vpop.permute.xlu0 %694
        %696 = vst [vmem:[#allocation1] ss:$2 sm:$0xff] %v439
        %s697 = scalar_lea.vmem [#allocation1], 16
        %698 = vst [vmem:[%s697] ss:$2 sm:$0xff] %v440
        %v699 = vld.sshfl [vmem:[#allocation1] sm:$0xff pattern:$0x75316420]
        %v700 = vld.sshfl [vmem:[#allocation1 + $0x8] sm:$0xff pattern:$0x75316420]
        %v701 = vld.sshfl [vmem:[#allocation1 + $0x10] sm:$0xff pattern:$0x75316420]
        %702 = vrot.lane.b32.xlu0 %v699, 110
        %v703 = vpop.permute.xlu0 %702
        %704 = vrot.lane.b32.xlu0 %v700, 110
        %v705 = vpop.permute.xlu0 %704
        %706 = vrot.lane.b32.xlu0 %v701, 110
        %v707 = vpop.permute.xlu0 %706
        %vm708 = vcmask 900096
        %v709 = vsel %vm708, %v703, %v705
        %v710 = vsel %vm708, %v705, %v707
        %v711 = vsel %vm462, %v695, 0
        %v713 = vsel %vm465, %v709, 0
        %v715 = vsel %vm465, %v710, 0
        %v717 = vsel %vm465, %v707, 0
        %719 = vmatpush.msra.mxu0 0.0
        %720 = vmatpush.msra.mxu0 0.0
        %721 = vmatpush.msra.mxu0 0.0
        %722 = vmatpush.msra.mxu0 0.0
        %723 = vmatpush.msra.mxu0 0.0
        %724 = vmatpush.msra.mxu0 0.0
        %725 = vmatpush.msra.mxu0 0.0
        %726 = vmatpush.msra.mxu0 0.0
        %727 = vmatpush.msra.mxu0 0.0
        %728 = vmatpush.msra.mxu0 0.0
        %729 = vmatpush.msra.mxu0 0.0
        %730 = vmatpush.msra.mxu0 0.0
        %731 = vmatpush.msra.mxu0 0.0
        %732 = vmatpush.msra.mxu0 0.0
        %733 = vmatpush.msra.mxu0 0.0
        %734 = vmatpush.msra.mxu0 %v713
        %735 = vmatmul.f32.gmra.mxu0 %v711
        %v736 = vpop.f32.mrf.mxu0
        %v737 = vadd.f32 0.0, %v736
        %738 = vdwg.mxu0
        %739 = vmatpush.msra.mxu0 0.0
        %740 = vmatpush.msra.mxu0 0.0
        %741 = vmatpush.msra.mxu0 0.0
        %742 = vmatpush.msra.mxu0 0.0
        %743 = vmatpush.msra.mxu0 0.0
        %744 = vmatpush.msra.mxu0 0.0
        %745 = vmatpush.msra.mxu0 0.0
        %746 = vmatpush.msra.mxu0 0.0
        %747 = vmatpush.msra.mxu0 0.0
        %748 = vmatpush.msra.mxu0 0.0
        %749 = vmatpush.msra.mxu0 0.0
        %750 = vmatpush.msra.mxu0 0.0
        %751 = vmatpush.msra.mxu0 0.0
        %752 = vmatpush.msra.mxu0 0.0
        %753 = vmatpush.msra.mxu0 0.0
        %754 = vmatpush.msra.mxu0 %v715
        %755 = vmatmul.f32.gmra.mxu0 %v711
        %v756 = vpop.f32.mrf.mxu0
        %v757 = vadd.f32 0.0, %v756
        %758 = vdwg.mxu0
        %759 = vmatpush.msra.mxu0 0.0
        %760 = vmatpush.msra.mxu0 0.0
        %761 = vmatpush.msra.mxu0 0.0
        %762 = vmatpush.msra.mxu0 0.0
        %763 = vmatpush.msra.mxu0 0.0
        %764 = vmatpush.msra.mxu0 0.0
        %765 = vmatpush.msra.mxu0 0.0
        %766 = vmatpush.msra.mxu0 0.0
        %767 = vmatpush.msra.mxu0 0.0
        %768 = vmatpush.msra.mxu0 0.0
        %769 = vmatpush.msra.mxu0 0.0
        %770 = vmatpush.msra.mxu0 0.0
        %771 = vmatpush.msra.mxu0 0.0
        %772 = vmatpush.msra.mxu0 0.0
        %773 = vmatpush.msra.mxu0 0.0
        %774 = vmatpush.msra.mxu0 %v717
        %775 = vmatmul.f32.gmra.mxu0 %v711
        %v776 = vpop.f32.mrf.mxu0
        %v777 = vadd.f32 0.0, %v776
        %778 = vdwg.mxu0
        %v779 = vadd.f32 %v691, %v737
        %v780 = vadd.f32 %v692, %v757
        %v781 = vadd.f32 %v693, %v777
        %782 = vrot.lane.b32.xlu0 %v441, 112
        %v783 = vpop.permute.xlu0 %782
        %784 = vst [vmem:[#allocation1] ss:$2 sm:$0xff] %v439
        %s785 = scalar_lea.vmem [#allocation1], 16
        %786 = vst [vmem:[%s785] ss:$2 sm:$0xff] %v440
        %v787 = vld.sshfl [vmem:[#allocation1] sm:$0xff pattern:$0x75316420]
        %v788 = vld.sshfl [vmem:[#allocation1 + $0x8] sm:$0xff pattern:$0x75316420]
        %v789 = vld.sshfl [vmem:[#allocation1 + $0x10] sm:$0xff pattern:$0x75316420]
        %790 = vrot.lane.b32.xlu0 %v787, 109
        %v791 = vpop.permute.xlu0 %790
        %792 = vrot.lane.b32.xlu0 %v788, 109
        %v793 = vpop.permute.xlu0 %792
        %794 = vrot.lane.b32.xlu0 %v789, 109
        %v795 = vpop.permute.xlu0 %794
        %vm796 = vcmask 891904
        %v797 = vsel %vm796, %v791, %v793
        %v798 = vsel %vm796, %v793, %v795
        %v799 = vsel %vm462, %v783, 0
        %v801 = vsel %vm465, %v797, 0
        %v803 = vsel %vm465, %v798, 0
        %v805 = vsel %vm465, %v795, 0
        %807 = vmatpush.msra.mxu0 0.0
        %808 = vmatpush.msra.mxu0 0.0
        %809 = vmatpush.msra.mxu0 0.0
        %810 = vmatpush.msra.mxu0 0.0
        %811 = vmatpush.msra.mxu0 0.0
        %812 = vmatpush.msra.mxu0 0.0
        %813 = vmatpush.msra.mxu0 0.0
        %814 = vmatpush.msra.mxu0 0.0
        %815 = vmatpush.msra.mxu0 0.0
        %816 = vmatpush.msra.mxu0 0.0
        %817 = vmatpush.msra.mxu0 0.0
        %818 = vmatpush.msra.mxu0 0.0
        %819 = vmatpush.msra.mxu0 0.0
        %820 = vmatpush.msra.mxu0 0.0
        %821 = vmatpush.msra.mxu0 0.0
        %822 = vmatpush.msra.mxu0 %v801
        %823 = vmatmul.f32.gmra.mxu0 %v799
        %v824 = vpop.f32.mrf.mxu0
        %v825 = vadd.f32 0.0, %v824
        %826 = vdwg.mxu0
        %827 = vmatpush.msra.mxu0 0.0
        %828 = vmatpush.msra.mxu0 0.0
        %829 = vmatpush.msra.mxu0 0.0
        %830 = vmatpush.msra.mxu0 0.0
        %831 = vmatpush.msra.mxu0 0.0
        %832 = vmatpush.msra.mxu0 0.0
        %833 = vmatpush.msra.mxu0 0.0
        %834 = vmatpush.msra.mxu0 0.0
        %835 = vmatpush.msra.mxu0 0.0
        %836 = vmatpush.msra.mxu0 0.0
        %837 = vmatpush.msra.mxu0 0.0
        %838 = vmatpush.msra.mxu0 0.0
        %839 = vmatpush.msra.mxu0 0.0
        %840 = vmatpush.msra.mxu0 0.0
        %841 = vmatpush.msra.mxu0 0.0
        %842 = vmatpush.msra.mxu0 %v803
        %843 = vmatmul.f32.gmra.mxu0 %v799
        %v844 = vpop.f32.mrf.mxu0
        %v845 = vadd.f32 0.0, %v844
        %846 = vdwg.mxu0
        %847 = vmatpush.msra.mxu0 0.0
        %848 = vmatpush.msra.mxu0 0.0
        %849 = vmatpush.msra.mxu0 0.0
        %850 = vmatpush.msra.mxu0 0.0
        %851 = vmatpush.msra.mxu0 0.0
        %852 = vmatpush.msra.mxu0 0.0
        %853 = vmatpush.msra.mxu0 0.0
        %854 = vmatpush.msra.mxu0 0.0
        %855 = vmatpush.msra.mxu0 0.0
        %856 = vmatpush.msra.mxu0 0.0
        %857 = vmatpush.msra.mxu0 0.0
        %858 = vmatpush.msra.mxu0 0.0
        %859 = vmatpush.msra.mxu0 0.0
        %860 = vmatpush.msra.mxu0 0.0
        %861 = vmatpush.msra.mxu0 0.0
        %862 = vmatpush.msra.mxu0 %v805
        %863 = vmatmul.f32.gmra.mxu0 %v799
        %v864 = vpop.f32.mrf.mxu0
        %v865 = vadd.f32 0.0, %v864
        %866 = vdwg.mxu0
        %v867 = vadd.f32 %v779, %v825
        %v868 = vadd.f32 %v780, %v845
        %v869 = vadd.f32 %v781, %v865
        %870 = vrot.lane.b32.xlu0 %v441, 108
        %v871 = vpop.permute.xlu0 %870
        %872 = vst [vmem:[#allocation1] ss:$2 sm:$0xff] %v439
        %s873 = scalar_lea.vmem [#allocation1], 16
        %874 = vst [vmem:[%s873] ss:$2 sm:$0xff] %v440
        %v875 = vld.sshfl [vmem:[#allocation1] sm:$0xff pattern:$0x75316420]
        %v876 = vld.sshfl [vmem:[#allocation1 + $0x8] sm:$0xff pattern:$0x75316420]
        %v877 = vld.sshfl [vmem:[#allocation1 + $0x10] sm:$0xff pattern:$0x75316420]
        %878 = vrot.lane.b32.xlu0 %v875, 108
        %v879 = vpop.permute.xlu0 %878
        %880 = vrot.lane.b32.xlu0 %v876, 108
        %v881 = vpop.permute.xlu0 %880
        %882 = vrot.lane.b32.xlu0 %v877, 108
        %v883 = vpop.permute.xlu0 %882
        %vm884 = vcmask 883712
        %v885 = vsel %vm884, %v879, %v881
        %v886 = vsel %vm884, %v881, %v883
        %v887 = vsel %vm462, %v871, 0
        %v889 = vsel %vm465, %v885, 0
        %v891 = vsel %vm465, %v886, 0
        %v893 = vsel %vm465, %v883, 0
        %895 = vmatpush.msra.mxu0 0.0
        %896 = vmatpush.msra.mxu0 0.0
        %897 = vmatpush.msra.mxu0 0.0
        %898 = vmatpush.msra.mxu0 0.0
        %899 = vmatpush.msra.mxu0 0.0
        %900 = vmatpush.msra.mxu0 0.0
        %901 = vmatpush.msra.mxu0 0.0
        %902 = vmatpush.msra.mxu0 0.0
        %903 = vmatpush.msra.mxu0 0.0
        %904 = vmatpush.msra.mxu0 0.0
        %905 = vmatpush.msra.mxu0 0.0
        %906 = vmatpush.msra.mxu0 0.0
        %907 = vmatpush.msra.mxu0 0.0
        %908 = vmatpush.msra.mxu0 0.0
        %909 = vmatpush.msra.mxu0 0.0
        %910 = vmatpush.msra.mxu0 %v889
        %911 = vmatmul.f32.gmra.mxu0 %v887
        %v912 = vpop.f32.mrf.mxu0
        %v913 = vadd.f32 0.0, %v912
        %914 = vdwg.mxu0
        %915 = vmatpush.msra.mxu0 0.0
        %916 = vmatpush.msra.mxu0 0.0
        %917 = vmatpush.msra.mxu0 0.0
        %918 = vmatpush.msra.mxu0 0.0
        %919 = vmatpush.msra.mxu0 0.0
        %920 = vmatpush.msra.mxu0 0.0
        %921 = vmatpush.msra.mxu0 0.0
        %922 = vmatpush.msra.mxu0 0.0
        %923 = vmatpush.msra.mxu0 0.0
        %924 = vmatpush.msra.mxu0 0.0
        %925 = vmatpush.msra.mxu0 0.0
        %926 = vmatpush.msra.mxu0 0.0
        %927 = vmatpush.msra.mxu0 0.0
        %928 = vmatpush.msra.mxu0 0.0
        %929 = vmatpush.msra.mxu0 0.0
        %930 = vmatpush.msra.mxu0 %v891
        %931 = vmatmul.f32.gmra.mxu0 %v887
        %v932 = vpop.f32.mrf.mxu0
        %v933 = vadd.f32 0.0, %v932
        %934 = vdwg.mxu0
        %935 = vmatpush.msra.mxu0 0.0
        %936 = vmatpush.msra.mxu0 0.0
        %937 = vmatpush.msra.mxu0 0.0
        %938 = vmatpush.msra.mxu0 0.0
        %939 = vmatpush.msra.mxu0 0.0
        %940 = vmatpush.msra.mxu0 0.0
        %941 = vmatpush.msra.mxu0 0.0
        %942 = vmatpush.msra.mxu0 0.0
        %943 = vmatpush.msra.mxu0 0.0
        %944 = vmatpush.msra.mxu0 0.0
        %945 = vmatpush.msra.mxu0 0.0
        %946 = vmatpush.msra.mxu0 0.0
        %947 = vmatpush.msra.mxu0 0.0
        %948 = vmatpush.msra.mxu0 0.0
        %949 = vmatpush.msra.mxu0 0.0
        %950 = vmatpush.msra.mxu0 %v893
        %951 = vmatmul.f32.gmra.mxu0 %v887
        %v952 = vpop.f32.mrf.mxu0
        %v953 = vadd.f32 0.0, %v952
        %954 = vdwg.mxu0
        %v955 = vadd.f32 %v867, %v913
        %v956 = vadd.f32 %v868, %v933
        %v957 = vadd.f32 %v869, %v953
        %958 = vrot.lane.b32.xlu0 %v441, 104
        %v959 = vpop.permute.xlu0 %958
        %960 = vst [vmem:[#allocation1] ss:$2 sm:$0xff] %v439
        %s961 = scalar_lea.vmem [#allocation1], 16
        %962 = vst [vmem:[%s961] ss:$2 sm:$0xff] %v440
        %v963 = vld.sshfl [vmem:[#allocation1] sm:$0xff pattern:$0x75316420]
        %v964 = vld.sshfl [vmem:[#allocation1 + $0x8] sm:$0xff pattern:$0x75316420]
        %v965 = vld.sshfl [vmem:[#allocation1 + $0x10] sm:$0xff pattern:$0x75316420]
        %966 = vrot.lane.b32.xlu0 %v963, 92
        %v967 = vpop.permute.xlu0 %966
        %968 = vrot.lane.b32.xlu0 %v964, 92
        %v969 = vpop.permute.xlu0 %968
        %970 = vrot.lane.b32.xlu0 %v965, 92
        %v971 = vpop.permute.xlu0 %970
        %vm972 = vcmask 752640
        %v973 = vsel %vm972, %v967, %v969
        %v974 = vsel %vm972, %v969, %v971
        %v975 = vsel %vm462, %v959, 0
        %v977 = vsel %vm465, %v973, 0
        %v979 = vsel %vm465, %v974, 0
        %v981 = vsel %vm465, %v971, 0
        %983 = vmatpush.msra.mxu0 0.0
        %984 = vmatpush.msra.mxu0 0.0
        %985 = vmatpush.msra.mxu0 0.0
        %986 = vmatpush.msra.mxu0 0.0
        %987 = vmatpush.msra.mxu0 0.0
        %988 = vmatpush.msra.mxu0 0.0
        %989 = vmatpush.msra.mxu0 0.0
        %990 = vmatpush.msra.mxu0 0.0
        %991 = vmatpush.msra.mxu0 0.0
        %992 = vmatpush.msra.mxu0 0.0
        %993 = vmatpush.msra.mxu0 0.0
        %994 = vmatpush.msra.mxu0 0.0
        %995 = vmatpush.msra.mxu0 0.0
        %996 = vmatpush.msra.mxu0 0.0
        %997 = vmatpush.msra.mxu0 0.0
        %998 = vmatpush.msra.mxu0 %v977
        %999 = vmatmul.f32.gmra.mxu0 %v975
        %v1000 = vpop.f32.mrf.mxu0
        %v1001 = vadd.f32 0.0, %v1000
        %1002 = vdwg.mxu0
        %1003 = vmatpush.msra.mxu0 0.0
        %1004 = vmatpush.msra.mxu0 0.0
        %1005 = vmatpush.msra.mxu0 0.0
        %1006 = vmatpush.msra.mxu0 0.0
        %1007 = vmatpush.msra.mxu0 0.0
        %1008 = vmatpush.msra.mxu0 0.0
        %1009 = vmatpush.msra.mxu0 0.0
        %1010 = vmatpush.msra.mxu0 0.0
        %1011 = vmatpush.msra.mxu0 0.0
        %1012 = vmatpush.msra.mxu0 0.0
        %1013 = vmatpush.msra.mxu0 0.0
        %1014 = vmatpush.msra.mxu0 0.0
        %1015 = vmatpush.msra.mxu0 0.0
        %1016 = vmatpush.msra.mxu0 0.0
        %1017 = vmatpush.msra.mxu0 0.0
        %1018 = vmatpush.msra.mxu0 %v979
        %1019 = vmatmul.f32.gmra.mxu0 %v975
        %v1020 = vpop.f32.mrf.mxu0
        %v1021 = vadd.f32 0.0, %v1020
        %1022 = vdwg.mxu0
        %1023 = vmatpush.msra.mxu0 0.0
        %1024 = vmatpush.msra.mxu0 0.0
        %1025 = vmatpush.msra.mxu0 0.0
        %1026 = vmatpush.msra.mxu0 0.0
        %1027 = vmatpush.msra.mxu0 0.0
        %1028 = vmatpush.msra.mxu0 0.0
        %1029 = vmatpush.msra.mxu0 0.0
        %1030 = vmatpush.msra.mxu0 0.0
        %1031 = vmatpush.msra.mxu0 0.0
        %1032 = vmatpush.msra.mxu0 0.0
        %1033 = vmatpush.msra.mxu0 0.0
        %1034 = vmatpush.msra.mxu0 0.0
        %1035 = vmatpush.msra.mxu0 0.0
        %1036 = vmatpush.msra.mxu0 0.0
        %1037 = vmatpush.msra.mxu0 0.0
        %1038 = vmatpush.msra.mxu0 %v981
        %1039 = vmatmul.f32.gmra.mxu0 %v975
        %v1040 = vpop.f32.mrf.mxu0
        %v1041 = vadd.f32 0.0, %v1040
        %1042 = vdwg.mxu0
        %v1043 = vadd.f32 %v955, %v1001
        %v1044 = vadd.f32 %v956, %v1021
        %v1045 = vadd.f32 %v957, %v1041
        %1046 = vrot.lane.b32.xlu0 %v441, 100
        %v1047 = vpop.permute.xlu0 %1046
        %1048 = vst [vmem:[#allocation1] ss:$2 sm:$0xff] %v439
        %s1049 = scalar_lea.vmem [#allocation1], 16
        %1050 = vst [vmem:[%s1049] ss:$2 sm:$0xff] %v440
        %v1051 = vld.sshfl [vmem:[#allocation1] sm:$0xff pattern:$0x75316420]
        %v1052 = vld.sshfl [vmem:[#allocation1 + $0x8] sm:$0xff pattern:$0x75316420]
        %v1053 = vld.sshfl [vmem:[#allocation1 + $0x10] sm:$0xff pattern:$0x75316420]
        %1054 = vrot.lane.b32.xlu0 %v1051, 91
        %v1055 = vpop.permute.xlu0 %1054
        %1056 = vrot.lane.b32.xlu0 %v1052, 91
        %v1057 = vpop.permute.xlu0 %1056
        %1058 = vrot.lane.b32.xlu0 %v1053, 91
        %v1059 = vpop.permute.xlu0 %1058
        %vm1060 = vcmask 744448
        %v1061 = vsel %vm1060, %v1055, %v1057
        %v1062 = vsel %vm1060, %v1057, %v1059
        %v1063 = vsel %vm462, %v1047, 0
        %v1065 = vsel %vm465, %v1061, 0
        %v1067 = vsel %vm465, %v1062, 0
        %v1069 = vsel %vm465, %v1059, 0
        %1071 = vmatpush.msra.mxu0 0.0
        %1072 = vmatpush.msra.mxu0 0.0
        %1073 = vmatpush.msra.mxu0 0.0
        %1074 = vmatpush.msra.mxu0 0.0
        %1075 = vmatpush.msra.mxu0 0.0
        %1076 = vmatpush.msra.mxu0 0.0
        %1077 = vmatpush.msra.mxu0 0.0
        %1078 = vmatpush.msra.mxu0 0.0
        %1079 = vmatpush.msra.mxu0 0.0
        %1080 = vmatpush.msra.mxu0 0.0
        %1081 = vmatpush.msra.mxu0 0.0
        %1082 = vmatpush.msra.mxu0 0.0
        %1083 = vmatpush.msra.mxu0 0.0
        %1084 = vmatpush.msra.mxu0 0.0
        %1085 = vmatpush.msra.mxu0 0.0
        %1086 = vmatpush.msra.mxu0 %v1065
        %1087 = vmatmul.f32.gmra.mxu0 %v1063
        %v1088 = vpop.f32.mrf.mxu0
        %v1089 = vadd.f32 0.0, %v1088
        %1090 = vdwg.mxu0
        %1091 = vmatpush.msra.mxu0 0.0
        %1092 = vmatpush.msra.mxu0 0.0
        %1093 = vmatpush.msra.mxu0 0.0
        %1094 = vmatpush.msra.mxu0 0.0
        %1095 = vmatpush.msra.mxu0 0.0
        %1096 = vmatpush.msra.mxu0 0.0
        %1097 = vmatpush.msra.mxu0 0.0
        %1098 = vmatpush.msra.mxu0 0.0
        %1099 = vmatpush.msra.mxu0 0.0
        %1100 = vmatpush.msra.mxu0 0.0
        %1101 = vmatpush.msra.mxu0 0.0
        %1102 = vmatpush.msra.mxu0 0.0
        %1103 = vmatpush.msra.mxu0 0.0
        %1104 = vmatpush.msra.mxu0 0.0
        %1105 = vmatpush.msra.mxu0 0.0
        %1106 = vmatpush.msra.mxu0 %v1067
        %1107 = vmatmul.f32.gmra.mxu0 %v1063
        %v1108 = vpop.f32.mrf.mxu0
        %v1109 = vadd.f32 0.0, %v1108
        %1110 = vdwg.mxu0
        %1111 = vmatpush.msra.mxu0 0.0
        %1112 = vmatpush.msra.mxu0 0.0
        %1113 = vmatpush.msra.mxu0 0.0
        %1114 = vmatpush.msra.mxu0 0.0
        %1115 = vmatpush.msra.mxu0 0.0
        %1116 = vmatpush.msra.mxu0 0.0
        %1117 = vmatpush.msra.mxu0 0.0
        %1118 = vmatpush.msra.mxu0 0.0
        %1119 = vmatpush.msra.mxu0 0.0
        %1120 = vmatpush.msra.mxu0 0.0
        %1121 = vmatpush.msra.mxu0 0.0
        %1122 = vmatpush.msra.mxu0 0.0
        %1123 = vmatpush.msra.mxu0 0.0
        %1124 = vmatpush.msra.mxu0 0.0
        %1125 = vmatpush.msra.mxu0 0.0
        %1126 = vmatpush.msra.mxu0 %v1069
        %1127 = vmatmul.f32.gmra.mxu0 %v1063
        %v1128 = vpop.f32.mrf.mxu0
        %v1129 = vadd.f32 0.0, %v1128
        %1130 = vdwg.mxu0
        %v1131 = vadd.f32 %v1043, %v1089
        %v1132 = vadd.f32 %v1044, %v1109
        %v1133 = vadd.f32 %v1045, %v1129
        %1134 = vrot.lane.b32.xlu0 %v441, 96
        %v1135 = vpop.permute.xlu0 %1134
        %1136 = vst [vmem:[#allocation1] ss:$2 sm:$0xff] %v439
        %s1137 = scalar_lea.vmem [#allocation1], 16
        %1138 = vst [vmem:[%s1137] ss:$2 sm:$0xff] %v440
        %v1139 = vld.sshfl [vmem:[#allocation1] sm:$0xff pattern:$0x75316420]
        %v1140 = vld.sshfl [vmem:[#allocation1 + $0x8] sm:$0xff pattern:$0x75316420]
        %v1141 = vld.sshfl [vmem:[#allocation1 + $0x10] sm:$0xff pattern:$0x75316420]
        %1142 = vrot.lane.b32.xlu0 %v1139, 90
        %v1143 = vpop.permute.xlu0 %1142
        %1144 = vrot.lane.b32.xlu0 %v1140, 90
        %v1145 = vpop.permute.xlu0 %1144
        %1146 = vrot.lane.b32.xlu0 %v1141, 90
        %v1147 = vpop.permute.xlu0 %1146
        %vm1148 = vcmask 736256
        %v1149 = vsel %vm1148, %v1143, %v1145
        %v1150 = vsel %vm1148, %v1145, %v1147
        %v1151 = vsel %vm462, %v1135, 0
        %v1153 = vsel %vm465, %v1149, 0
        %v1155 = vsel %vm465, %v1150, 0
        %v1157 = vsel %vm465, %v1147, 0
        %1159 = vmatpush.msra.mxu0 0.0
        %1160 = vmatpush.msra.mxu0 0.0
        %1161 = vmatpush.msra.mxu0 0.0
        %1162 = vmatpush.msra.mxu0 0.0
        %1163 = vmatpush.msra.mxu0 0.0
        %1164 = vmatpush.msra.mxu0 0.0
        %1165 = vmatpush.msra.mxu0 0.0
        %1166 = vmatpush.msra.mxu0 0.0
        %1167 = vmatpush.msra.mxu0 0.0
        %1168 = vmatpush.msra.mxu0 0.0
        %1169 = vmatpush.msra.mxu0 0.0
        %1170 = vmatpush.msra.mxu0 0.0
        %1171 = vmatpush.msra.mxu0 0.0
        %1172 = vmatpush.msra.mxu0 0.0
        %1173 = vmatpush.msra.mxu0 0.0
        %1174 = vmatpush.msra.mxu0 %v1153
        %1175 = vmatmul.f32.gmra.mxu0 %v1151
        %v1176 = vpop.f32.mrf.mxu0
        %v1177 = vadd.f32 0.0, %v1176
        %1178 = vdwg.mxu0
        %1179 = vmatpush.msra.mxu0 0.0
        %1180 = vmatpush.msra.mxu0 0.0
        %1181 = vmatpush.msra.mxu0 0.0
        %1182 = vmatpush.msra.mxu0 0.0
        %1183 = vmatpush.msra.mxu0 0.0
        %1184 = vmatpush.msra.mxu0 0.0
        %1185 = vmatpush.msra.mxu0 0.0
        %1186 = vmatpush.msra.mxu0 0.0
        %1187 = vmatpush.msra.mxu0 0.0
        %1188 = vmatpush.msra.mxu0 0.0
        %1189 = vmatpush.msra.mxu0 0.0
        %1190 = vmatpush.msra.mxu0 0.0
        %1191 = vmatpush.msra.mxu0 0.0
        %1192 = vmatpush.msra.mxu0 0.0
        %1193 = vmatpush.msra.mxu0 0.0
        %1194 = vmatpush.msra.mxu0 %v1155
        %1195 = vmatmul.f32.gmra.mxu0 %v1151
        %v1196 = vpop.f32.mrf.mxu0
        %v1197 = vadd.f32 0.0, %v1196
        %1198 = vdwg.mxu0
        %1199 = vmatpush.msra.mxu0 0.0
        %1200 = vmatpush.msra.mxu0 0.0
        %1201 = vmatpush.msra.mxu0 0.0
        %1202 = vmatpush.msra.mxu0 0.0
        %1203 = vmatpush.msra.mxu0 0.0
        %1204 = vmatpush.msra.mxu0 0.0
        %1205 = vmatpush.msra.mxu0 0.0
        %1206 = vmatpush.msra.mxu0 0.0
        %1207 = vmatpush.msra.mxu0 0.0
        %1208 = vmatpush.msra.mxu0 0.0
        %1209 = vmatpush.msra.mxu0 0.0
        %1210 = vmatpush.msra.mxu0 0.0
        %1211 = vmatpush.msra.mxu0 0.0
        %1212 = vmatpush.msra.mxu0 0.0
        %1213 = vmatpush.msra.mxu0 0.0
        %1214 = vmatpush.msra.mxu0 %v1157
        %1215 = vmatmul.f32.gmra.mxu0 %v1151
        %v1216 = vpop.f32.mrf.mxu0
        %v1217 = vadd.f32 0.0, %v1216
        %1218 = vdwg.mxu0
        %v1219 = vadd.f32 %v1131, %v1177
        %v1220 = vadd.f32 %v1132, %v1197
        %v1221 = vadd.f32 %v1133, %v1217
        %v1222 = vmul.f32 %v1219, %v438
        %v1223 = vmul.f32 %v1220, %v438
        %v1224 = vmul.f32 %v1221, %v438
        %v1225 = vld [vmem:[%s4] sm:$0xff]
        %1227 = vset.pattern.permute.xlu0 0
        %1228 = vperm.xlu0 %1227, %v1225
        %v1229 = vpop.permute.xlu0 %1228
        %v1231 = vadd.f32 %v1222, %v1229
        %v1232 = vadd.f32 %v1223, %v1229
        %v1233 = vadd.f32 %v1224, %v1229
        %vm1234 = vcmask 130048
        %1235 = vst.msk [vmem:[%s300] sm:$0xff] %vm1234, %v1231
        %1237 = vrot.lane.b32.xlu0 %v1231, 126
        %v1238 = vpop.permute.xlu0 %1237
        %vm1240 = vcmask 261248
        %1241 = vst.msk [vmem:[%s300] sm:$0xff] %vm1240, %v1238
        %1242 = vrot.lane.b32.xlu0 %v1231, 124
        %v1243 = vpop.permute.xlu0 %1242
        %vm1245 = vcmask 392448
        %1246 = vst.msk [vmem:[%s300] sm:$0xff] %vm1245, %v1243
        %1247 = vrot.lane.b32.xlu0 %v1231, 122
        %v1248 = vpop.permute.xlu0 %1247
        %vm1250 = vcmask 523648
        %1251 = vst.msk [vmem:[%s300] sm:$0xff] %vm1250, %v1248
        %1252 = vrot.lane.b32.xlu0 %v1231, 120
        %v1253 = vpop.permute.xlu0 %1252
        %vm1255 = vcmask 654848
        %1256 = vst.msk [vmem:[%s300] sm:$0xff] %vm1255, %v1253
        %1257 = vrot.lane.b32.xlu0 %v1231, 118
        %v1258 = vpop.permute.xlu0 %1257
        %vm1260 = vcmask 786048
        %1261 = vst.msk [vmem:[%s300] sm:$0xff] %vm1260, %v1258
        %1262 = vrot.lane.b32.xlu0 %v1231, 116
        %v1263 = vpop.permute.xlu0 %1262
        %vm1265 = vcmask 917248
        %1266 = vst.msk [vmem:[%s300] sm:$0xff] %vm1265, %v1263
        %1268 = vrot.lane.b32.xlu0 %v1231, 114
        %v1269 = vpop.permute.xlu0 %1268
        %1270 = vrot.lane.b32.xlu0 %v1232, 114
        %v1271 = vpop.permute.xlu0 %1270
        %vm1272 = vcmask 932864
        %v1273 = vsel %vm1272, %v1269, %v1271
        %vm1275 = vcmask 1048448
        %1276 = vst.msk [vmem:[%s300] sm:$0xff] %vm1275, %v1273
        %1277 = vrot.lane.b32.xlu0 %v1232, 112
        %v1278 = vpop.permute.xlu0 %1277
        %1280 = vst.msk [vmem:[%s300 + $0x8] sm:$0xff] %vm1234, %v1278
        %1281 = vrot.lane.b32.xlu0 %v1232, 110
        %v1282 = vpop.permute.xlu0 %1281
        %1284 = vst.msk [vmem:[%s300 + $0x8] sm:$0xff] %vm1240, %v1282
        %1285 = vrot.lane.b32.xlu0 %v1232, 108
        %v1286 = vpop.permute.xlu0 %1285
        %1288 = vst.msk [vmem:[%s300 + $0x8] sm:$0xff] %vm1245, %v1286
        %1289 = vrot.lane.b32.xlu0 %v1232, 106
        %v1290 = vpop.permute.xlu0 %1289
        %1292 = vst.msk [vmem:[%s300 + $0x8] sm:$0xff] %vm1250, %v1290
        %1293 = vrot.lane.b32.xlu0 %v1232, 104
        %v1294 = vpop.permute.xlu0 %1293
        %1296 = vst.msk [vmem:[%s300 + $0x8] sm:$0xff] %vm1255, %v1294
        %1297 = vrot.lane.b32.xlu0 %v1232, 102
        %v1298 = vpop.permute.xlu0 %1297
        %1300 = vst.msk [vmem:[%s300 + $0x8] sm:$0xff] %vm1260, %v1298
        %1302 = vrot.lane.b32.xlu0 %v1232, 100
        %v1303 = vpop.permute.xlu0 %1302
        %1304 = vrot.lane.b32.xlu0 %v1233, 100
        %v1305 = vpop.permute.xlu0 %1304
        %vm1306 = vcmask 818176
        %v1307 = vsel %vm1306, %v1303, %v1305
        %1309 = vst.msk [vmem:[%s300 + $0x8] sm:$0xff] %vm1265, %v1307
        %1310 = vrot.lane.b32.xlu0 %v1233, 98
        %v1311 = vpop.permute.xlu0 %1310
        %1313 = vst.msk [vmem:[%s300 + $0x8] sm:$0xff] %vm1275, %v1311
        %1314 = vst.msk [vmem:[%s316] sm:$0xff] %vm381, %v422
        %1315 = vst.msk [vmem:[%s312] sm:$0x1] %vm334, %v375
        %s1316 = sand.u32 %s146, 1
        %s1317 = scalar_lea.sflag [#allocation4], %s1316
        %s1318 = sand.u32 %s146, 1
        %s1319 = smul.addr %s1318, 16
        %s1320 = scalar_lea.vmem [#allocation5], %s1319
        %p1321 = scmp.lt.s32.totalorder %s28, 1
        %s1322 = scalar_select %p1321, %s28, 1
        %s1323 = smul.addr %s1322, 8
        %s1324 = scalar_lea.vmem %s6, %s1323
        %s1325 = sand.u32 %s198, 1
        %s1326 = scalar_lea.sflag [#allocation7], %s1325
        %s1327 = sand.u32 %s198, 1
        %s1328 = scalar_lea.vmem [#allocation6], %s1327
        // Predicated region
        $region45: #{tpu_custom_call.1} parent=39 // pred_check
          %p1329 = pneg %p156
        $region46: #{tpu_custom_call.1} parent=39 // pred_check_branch
          %1331 = sbr.rel (%p1329) target = $region48
        $region47: #{tpu_custom_call.1} parent=39 // pred_region
          %1333 = vsyncadd %s1317, 0
          %s1334 = smul.addr %s28, 2
          %s1335 = smul.addr %s1334, 8
          %s1336 = scalar_lea.hbm %s5, %s1335
          %s1338 = sshll.u32 %s1320, 4
          %s1339 = int_to_ptr.vmem [resolvable:$true] %s1338
          %s1340 = sshll.u32 %s1336, 4
          %s1341 = int_to_ptr.hbm [resolvable:$true] %s1340
          %1343 = dma.vmem_to_hbm [thread:$0]  %s1339, 256, %s1341, %s1317
        $region48: #{tpu_custom_call.1} parent=39 // pred_fallthru
          _
        // Predicated region
        $region49: #{tpu_custom_call.1} parent=39 // pred_check
          %p1344 = pneg %p182
        $region50: #{tpu_custom_call.1} parent=39 // pred_check_branch
          %1346 = sbr.rel (%p1344) target = $region52
        $region51: #{tpu_custom_call.1} parent=39 // pred_region
          _
        $region52: #{tpu_custom_call.1} parent=39 // pred_fallthru
          _
        // Predicated region
        $region53: #{tpu_custom_call.1} parent=39 // pred_check
          %p1347 = pneg %p208
        $region54: #{tpu_custom_call.1} parent=39 // pred_check_branch
          %1349 = sbr.rel (%p1347) target = $region56
        $region55: #{tpu_custom_call.1} parent=39 // pred_region
          %1351 = vsyncadd %s1326, 0
          %s1352 = scalar_lea.hbm %s7, %s28
          %s1354 = sshll.u32 %s1328, 4
          %s1355 = int_to_ptr.vmem [resolvable:$true] %s1354
          %s1356 = sshll.u32 %s1352, 4
          %s1357 = int_to_ptr.hbm [resolvable:$true] %s1356
          %1359 = dma.vmem_to_hbm [thread:$0]  %s1355, 16, %s1357, %s1326
        $region56: #{tpu_custom_call.1} parent=39 // pred_fallthru
          _
      $region40: #{tpu_custom_call.1} parent=5 // pred_fallthru
        _
      %p1360 = scmp.le.s32.totalorder 2, %s23
      // Predicated region
      $region57: #{tpu_custom_call.1} parent=5 // pred_check
        %p1361 = pneg %p1360
      $region58: #{tpu_custom_call.1} parent=5 // pred_check_branch
        %1363 = sbr.rel (%p1361) target = $region60
      $region59: #{tpu_custom_call.1} parent=5 // pred_region
        %s1364 = ssub.s32 %s23, 2
        // Predicated region
        $region61: #{tpu_custom_call.1} parent=59 // pred_check
          %p1365 = pneg %p162
        $region62: #{tpu_custom_call.1} parent=59 // pred_check_branch
          %1367 = sbr.rel (%p1365) target = $region64
        $region63: #{tpu_custom_call.1} parent=59 // pred_region
          %s1368 = sand.u32 %s147, 1
          %s1369 = scalar_lea.sflag [#allocation4], %s1368
          %s1370 = sand.u32 %s147, 1
          %s1371 = smul.addr %s1370, 16
          %s1372 = scalar_lea.vmem [#allocation5], %s1371
          %1374 = dma.done %s1369, 256
        $region64: #{tpu_custom_call.1} parent=59 // pred_fallthru
          _
        // Predicated region
        $region65: #{tpu_custom_call.1} parent=59 // pred_check
          %p1375 = pneg %p188
        $region66: #{tpu_custom_call.1} parent=59 // pred_check_branch
          %1377 = sbr.rel (%p1375) target = $region68
        $region67: #{tpu_custom_call.1} parent=59 // pred_region
          %p1378 = scmp.lt.s32.totalorder %s29, 1
          %s1379 = scalar_select %p1378, %s29, 1
          %s1380 = smul.addr %s1379, 8
          %s1381 = scalar_lea.vmem %s6, %s1380
        $region68: #{tpu_custom_call.1} parent=59 // pred_fallthru
          _
        // Predicated region
        $region69: #{tpu_custom_call.1} parent=59 // pred_check
          %p1382 = pneg %p214
        $region70: #{tpu_custom_call.1} parent=59 // pred_check_branch
          %1384 = sbr.rel (%p1382) target = $region72
        $region71: #{tpu_custom_call.1} parent=59 // pred_region
          %s1385 = sand.u32 %s199, 1
          %s1386 = scalar_lea.sflag [#allocation7], %s1385
          %s1387 = sand.u32 %s199, 1
          %s1388 = scalar_lea.vmem [#allocation6], %s1387
          %1390 = dma.done %s1386, 16
        $region72: #{tpu_custom_call.1} parent=59 // pred_fallthru
          _
      $region60: #{tpu_custom_call.1} parent=5 // pred_fallthru
        _
    $region6: #{tpu_custom_call.1} parent=1 // loop_footer
      %s27 = sadd.s32 1, %s23
    $region7: #{tpu_custom_call.1} parent=1 // loop_footer_branch
      %22 = sbr.rel target = $region3
    $region8: #{tpu_custom_call.1} parent=1 // loop_exit
      _
    %1391 = vsyncpa [#allocation3], 1
    %s1392 = scalar_lea.sflag [#allocation3], 1
    %1393 = vsyncpa %s1392, 1
    %1394 = vsyncpa [#allocation4], 1
    %s1395 = scalar_lea.sflag [#allocation4], 1
    %1396 = vsyncpa %s1395, 1
    %1397 = vsyncpa [#allocation7], 1
    %s1398 = scalar_lea.sflag [#allocation7], 1
    %1399 = vsyncpa %s1398, 1

</llo_original>
